<compile_context>
chip_gen: v7x
topology: tpu7x:2x2x1
jax: 0.10.0
libtpu: 0.0.40
codegen_flags: <defaults>
</compile_context>

<pallas_src>
import functools

import jax
import jax.numpy as jnp
from jax import lax
from jax.experimental import pallas as pl
from jax.experimental.pallas import tpu as pltpu

LANES = 2048            # lanes per tile (multiple of 128)
MAX_TILE_ROWS = 256     # default tile height (multiple of 8); 2 MiB f32 tiles
NEG = -1e30             # finite "-inf" mask value (see NOTE above)


def _round_up(x: int, n: int) -> int:
    return -(-x // n) * n


def _circle_loss_kernel(sp_ref, sn_ref, lse_p_ref, lse_n_ref,
                        mp_acc, sp_acc, mn_acc, sn_acc,
                        *, m: float, gamma: float,
                        nb_p: int, nb_n: int, rem_p: int, rem_n: int,
                        tile_p: int, tile_n: int):
    blk = pl.program_id(0)

    @pl.when(blk == 0)
    def _():
        mp_acc[...] = jnp.full_like(mp_acc, NEG)
        mn_acc[...] = jnp.full_like(mn_acc, NEG)
        sp_acc[...] = jnp.zeros_like(sp_acc)
        sn_acc[...] = jnp.zeros_like(sn_acc)

    two_m = 2.0 * m

    def update(m_acc, s_acc, x, tile_rows):
        # Fold the tile into the (8, LANES) accumulators: vreg-wise VPU
        # max/add + EUP exp only; cross-sublane / cross-lane reductions are
        # deferred to the finalize step.
        xr = x.reshape(tile_rows // 8, 8, LANES)
        tile_max = jnp.max(xr, axis=0)                       # (8, LANES)
        new_m = jnp.maximum(m_acc[...], tile_max)
        s_acc[...] = (s_acc[...] * jnp.exp(m_acc[...] - new_m)
                      + jnp.sum(jnp.exp(xr - new_m[None]), axis=0))
        m_acc[...] = new_m

    def accumulate(x_ref, m_acc, s_acc, *, nb_i, rem_i, tile_rows, positive):
        tile_elems = tile_rows * LANES

        def logits():
            # NOTE: PyTorch detaches ap/an; forward values are identical.
            # TODO(synk): custom_vjp treating ap/an as constants is needed for
            # gradient parity before training use.
            v = x_ref[...]
            t = ((1.0 - m) - v) if positive else (v - m)
            a = jnp.maximum(t + two_m, 0.0)     # clamp_min(1+m-sp,0) / clamp_min(sn+m,0)
            return a * t * gamma

        last = nb_i - 1
        if last > 0:
            # Interior tiles of this input: fully valid, no mask work at all.
            @pl.when(blk < last)
            def _():
                update(m_acc, s_acc, logits(), tile_rows)

        # Boundary tile: mask padding / partial-block garbage against a static
        # remaining-count using a local (per-tile) int32 iota.  Grid steps past
        # this input's last block are skipped entirely (and their DMAs are
        # elided by the clamped index_map).
        @pl.when(blk == last)
        def _():
            x = logits()
            if rem_i != tile_elems:
                lidx = (lax.broadcasted_iota(jnp.int32, (tile_rows, LANES), 0)
                        * LANES
                        + lax.broadcasted_iota(jnp.int32, (tile_rows, LANES), 1))
                x = jnp.where(lidx < rem_i, x, NEG)
            update(m_acc, s_acc, x, tile_rows)

    accumulate(sp_ref, mp_acc, sp_acc, nb_i=nb_p, rem_i=rem_p,
               tile_rows=tile_p, positive=True)
    accumulate(sn_ref, mn_acc, sn_acc, nb_i=nb_n, rem_i=rem_n,
               tile_rows=tile_n, positive=False)

    @pl.when(blk == pl.num_programs(0) - 1)
    def _():
        def finalize(m_acc, s_acc):
            mx = jnp.max(m_acc[...], keepdims=True)                      # (1, 1)
            sm = jnp.sum(s_acc[...] * jnp.exp(m_acc[...] - mx), keepdims=True)
            return mx + jnp.log(sm)
        lse_p_ref[...] = finalize(mp_acc, sp_acc)
        lse_n_ref[...] = finalize(mn_acc, sn_acc)


def circle_loss(sp, sn, m: float = 0.25, gamma: float = 256.0,
                *, max_tile_rows: int = MAX_TILE_ROWS):
    """Pallas TPU implementation of CircleLoss.forward. Returns a scalar f32."""
    sp = jnp.asarray(sp, jnp.float32).reshape(-1)
    sn = jnp.asarray(sn, jnp.float32).reshape(-1)
    np_valid = int(sp.shape[0])
    nn_valid = int(sn.shape[0])
    assert np_valid >= 1 and nn_valid >= 1
    assert max_tile_rows % 8 == 0 and max_tile_rows >= 8

    def prep(x, n):
        # Pad only to a whole number of (8, LANES) sublane groups (<= 56 KiB of
        # pad); the following reshape is a metadata op.  Each input keeps its
        # own tile height / block count.
        rows = _round_up(max(pl.cdiv(n, LANES), 1), 8)
        tile_rows = min(max_tile_rows, rows)
        nb_i = pl.cdiv(rows, tile_rows)
        rem_i = n - (nb_i - 1) * tile_rows * LANES      # elements in last block
        x = jnp.pad(x, (0, rows * LANES - n))
        return x.reshape(rows, LANES), tile_rows, nb_i, rem_i

    sp2, tile_p, nb_p, rem_p = prep(sp, np_valid)
    sn2, tile_n, nb_n, rem_n = prep(sn, nn_valid)
    nb = max(nb_p, nb_n)

    def in_map(nb_i):
        if nb_i == nb:
            return lambda i: (i, 0)
        # Clamp the shorter stream: once exhausted, its block index stops
        # changing, so Pallas elides the (unused) DMA for those steps.
        last = nb_i - 1
        return lambda i: (jnp.minimum(i, last), 0)

    kernel = functools.partial(
        _circle_loss_kernel, m=float(m), gamma=float(gamma),
        nb_p=nb_p, nb_n=nb_n, rem_p=rem_p, rem_n=rem_n,
        tile_p=tile_p, tile_n=tile_n)

    lse_p, lse_n = pl.pallas_call(
        kernel,
        out_shape=(jax.ShapeDtypeStruct((1, 1), jnp.float32),
                   jax.ShapeDtypeStruct((1, 1), jnp.float32)),
        grid=(nb,),
        in_specs=[pl.BlockSpec((tile_p, LANES), in_map(nb_p)),
                  pl.BlockSpec((tile_n, LANES), in_map(nb_n))],
        out_specs=(pl.BlockSpec((1, 1), lambda i: (0, 0)),
                   pl.BlockSpec((1, 1), lambda i: (0, 0))),
        scratch_shapes=[pltpu.VMEM((8, LANES), jnp.float32)] * 4,
        compiler_params=pltpu.CompilerParams(
            dimension_semantics=("arbitrary",),
            vmem_limit_bytes=40 * 1024 * 1024),
    )(sp2, sn2)

    # Tiny epilogue in plain XLA.
    return jax.nn.softplus(lse_p[0, 0] + lse_n[0, 0])


def _reference_circle_loss(sp, sn, m, gamma):
    ap = jnp.maximum(-sp + 1.0 + m, 0.0)
    an = jnp.maximum(sn + m, 0.0)
    logit_p = -ap * (sp - (1.0 - m)) * gamma
    logit_n = an * (sn - m) * gamma
    z = jax.nn.logsumexp(logit_n, axis=0) + jax.nn.logsumexp(logit_p, axis=0)
    return jax.nn.softplus(z)


if __name__ == "__main__":
    key = jax.random.PRNGKey(0)
    k1, k2, k3, k4 = jax.random.split(key, 4)

    m, gamma = 0.25, 64.0

    # Small case (typical CircleLoss usage: 1-D similarity vectors).
    sp_s = jax.random.uniform(k1, (8,), jnp.float32, minval=-1.0, maxval=1.0)
    sn_s = jax.random.uniform(k2, (8,), jnp.float32, minval=-1.0, maxval=1.0)
    loss_s = jax.block_until_ready(circle_loss(sp_s, sn_s, m, gamma))
    ref_s = _reference_circle_loss(sp_s, sn_s, m, gamma)
    assert jnp.allclose(loss_s, ref_s, rtol=1e-5, atol=1e-5), (loss_s, ref_s)

    # Unequal lengths with a deliberately small tile: exercises multi-block
    # streaming, the clamped/elided shorter stream, boundary masking and a
    # partial last block.
    sp_l = jax.random.uniform(k3, (5000,), jnp.float32, minval=-1.0, maxval=1.0)
    sn_l = jax.random.uniform(k4, (40000,), jnp.float32, minval=-1.0, maxval=1.0)
    loss_l = jax.block_until_ready(
        circle_loss(sp_l, sn_l, m, gamma, max_tile_rows=16))
    ref_l = _reference_circle_loss(sp_l, sn_l, m, gamma)
    assert jnp.allclose(loss_l, ref_l, rtol=1e-4, atol=1e-4), (loss_l, ref_l)

    # Same data through the default (large-tile) path.
    loss_d = jax.block_until_ready(circle_loss(sp_l, sn_l, m, gamma))
    assert jnp.allclose(loss_d, ref_l, rtol=1e-4, atol=1e-4), (loss_d, ref_l)

    print("KERNEL_OK")
</pallas_src>

<mosaic_0001>
module attributes {stable_mosaic.version = 11 : i64} {
  func.func @_circle_loss_kernel(%arg0: i32, %arg1: memref<8x2048xf32, #tpu.memory_space<vmem>>, %arg2: memref<8x2048xf32, #tpu.memory_space<vmem>>, %arg3: memref<1x1xf32, #tpu.memory_space<vmem>>, %arg4: memref<1x1xf32, #tpu.memory_space<vmem>>, %arg5: memref<8x2048xf32, #tpu.memory_space<vmem>>, %arg6: memref<8x2048xf32, #tpu.memory_space<vmem>>, %arg7: memref<8x2048xf32, #tpu.memory_space<vmem>>, %arg8: memref<8x2048xf32, #tpu.memory_space<vmem>>) attributes {dimension_semantics = [#tpu.dimension_semantics<arbitrary>], iteration_bounds = array<i64: 1>, scalar_prefetch = 0 : i64, scratch_operands = 4 : i64, tpu.core_type = #tpu.core_type<tc>, window_params = [{transform_indices = @transform_0, window_bounds = array<i64: 8, 2048>}, {transform_indices = @transform_1, window_bounds = array<i64: 8, 2048>}, {pipeline_mode = #tpu.pipeline_mode<synchronous>, transform_indices = @transform_2, window_bounds = array<i64: 1, 1>}, {pipeline_mode = #tpu.pipeline_mode<synchronous>, transform_indices = @transform_3, window_bounds = array<i64: 1, 1>}]} {
    %c0_i32 = arith.constant 0 : i32
    %0 = arith.cmpi eq, %arg0, %c0_i32 : i32
    %1 = arith.extui %0 : i1 to i32
    %c0_i32_0 = arith.constant 0 : i32
    %2 = arith.cmpi ne, %1, %c0_i32_0 : i32
    scf.if %2 {
      %cst = arith.constant -1.000000e+30 : f32
      %12 = vector.broadcast %cst : f32 to vector<8x2048xf32>
      %c0 = arith.constant 0 : index
      %c0_7 = arith.constant 0 : index
      %13 = vector.load %arg5[%c0, %c0_7] : memref<8x2048xf32, #tpu.memory_space<vmem>>, vector<8x2048xf32>
      tpu.vector_store %arg5[%c0, %c0_7], %12 {strides = array<i32>} : memref<8x2048xf32, #tpu.memory_space<vmem>>, vector<8x2048xf32>,
      %cst_8 = arith.constant -1.000000e+30 : f32
      %14 = vector.broadcast %cst_8 : f32 to vector<8x2048xf32>
      %c0_9 = arith.constant 0 : index
      %c0_10 = arith.constant 0 : index
      %15 = vector.load %arg7[%c0_9, %c0_10] : memref<8x2048xf32, #tpu.memory_space<vmem>>, vector<8x2048xf32>
      tpu.vector_store %arg7[%c0_9, %c0_10], %14 {strides = array<i32>} : memref<8x2048xf32, #tpu.memory_space<vmem>>, vector<8x2048xf32>,
      %cst_11 = arith.constant 0.000000e+00 : f32
      %16 = vector.broadcast %cst_11 : f32 to vector<8x2048xf32>
      %c0_12 = arith.constant 0 : index
      %c0_13 = arith.constant 0 : index
      %17 = vector.load %arg6[%c0_12, %c0_13] : memref<8x2048xf32, #tpu.memory_space<vmem>>, vector<8x2048xf32>
      tpu.vector_store %arg6[%c0_12, %c0_13], %16 {strides = array<i32>} : memref<8x2048xf32, #tpu.memory_space<vmem>>, vector<8x2048xf32>,
      %cst_14 = arith.constant 0.000000e+00 : f32
      %18 = vector.broadcast %cst_14 : f32 to vector<8x2048xf32>
      %c0_15 = arith.constant 0 : index
      %c0_16 = arith.constant 0 : index
      %19 = vector.load %arg8[%c0_15, %c0_16] : memref<8x2048xf32, #tpu.memory_space<vmem>>, vector<8x2048xf32>
      tpu.vector_store %arg8[%c0_15, %c0_16], %18 {strides = array<i32>} : memref<8x2048xf32, #tpu.memory_space<vmem>>, vector<8x2048xf32>,
    } else {
    }
    %c0_i32_1 = arith.constant 0 : i32
    %3 = arith.cmpi eq, %arg0, %c0_i32_1 : i32
    %4 = arith.extui %3 : i1 to i32
    %c0_i32_2 = arith.constant 0 : i32
    %5 = arith.cmpi ne, %4, %c0_i32_2 : i32
    scf.if %5 {
      %c0 = arith.constant 0 : index
      %c0_7 = arith.constant 0 : index
      %12 = vector.load %arg1[%c0, %c0_7] : memref<8x2048xf32, #tpu.memory_space<vmem>>, vector<8x2048xf32>
      %cst = arith.constant 7.500000e-01 : f32
      %13 = vector.broadcast %cst : f32 to vector<8x2048xf32>
      %14 = arith.subf %13, %12 : vector<8x2048xf32>
      %cst_8 = arith.constant 5.000000e-01 : f32
      %15 = vector.broadcast %cst_8 : f32 to vector<8x2048xf32>
      %16 = arith.addf %14, %15 : vector<8x2048xf32>
      %cst_9 = arith.constant 0.000000e+00 : f32
      %17 = vector.broadcast %cst_9 : f32 to vector<8x2048xf32>
      %18 = arith.maximumf %16, %17 : vector<8x2048xf32>
      %19 = arith.mulf %18, %14 : vector<8x2048xf32>
      %cst_10 = arith.constant 6.400000e+01 : f32
      %20 = vector.broadcast %cst_10 : f32 to vector<8x2048xf32>
      %21 = arith.mulf %19, %20 : vector<8x2048xf32>
      %22 = tpu.iota {dimensions = array<i32: 0>} : vector<8x2048xi32>
      %c2048_i32 = arith.constant 2048 : i32
      %23 = vector.broadcast %c2048_i32 : i32 to vector<8x2048xi32>
      %24 = arith.muli %22, %23 : vector<8x2048xi32>
      %25 = tpu.iota {dimensions = array<i32: 1>} : vector<8x2048xi32>
      %26 = arith.addi %24, %25 : vector<8x2048xi32>
      %c8_i32 = arith.constant 8 : i32
      %27 = vector.broadcast %c8_i32 : i32 to vector<8x2048xi32>
      %28 = arith.cmpi slt, %26, %27 : vector<8x2048xi32>
      %cst_11 = arith.constant -1.000000e+30 : f32
      %29 = vector.broadcast %cst_11 : f32 to vector<8x2048xf32>
      %30 = arith.select %28, %21, %29 : vector<8x2048xi1>, vector<8x2048xf32>
      %31 = vector.shape_cast %30 : vector<8x2048xf32> to vector<1x8x2048xf32>
      %cst_12 = arith.constant dense<0xFF800000> : vector<8x2048xf32>
      %32 = vector.multi_reduction <maximumf>, %31, %cst_12 [0] : vector<1x8x2048xf32> to vector<8x2048xf32>
      %c0_13 = arith.constant 0 : index
      %c0_14 = arith.constant 0 : index
      %33 = vector.load %arg5[%c0_13, %c0_14] : memref<8x2048xf32, #tpu.memory_space<vmem>>, vector<8x2048xf32>
      %34 = arith.maximumf %33, %32 : vector<8x2048xf32>
      %c0_15 = arith.constant 0 : index
      %c0_16 = arith.constant 0 : index
      %35 = vector.load %arg6[%c0_15, %c0_16] : memref<8x2048xf32, #tpu.memory_space<vmem>>, vector<8x2048xf32>
      %c0_17 = arith.constant 0 : index
      %c0_18 = arith.constant 0 : index
      %36 = vector.load %arg5[%c0_17, %c0_18] : memref<8x2048xf32, #tpu.memory_space<vmem>>, vector<8x2048xf32>
      %37 = arith.subf %36, %34 : vector<8x2048xf32>
      %38 = math.exp %37 : vector<8x2048xf32>
      %39 = arith.mulf %35, %38 : vector<8x2048xf32>
      %40 = vector.shape_cast %34 : vector<8x2048xf32> to vector<1x8x2048xf32>
      %41 = arith.subf %31, %40 : vector<1x8x2048xf32>
      %42 = math.exp %41 : vector<1x8x2048xf32>
      %cst_19 = arith.constant dense<0.000000e+00> : vector<8x2048xf32>
      %43 = vector.multi_reduction <add>, %42, %cst_19 [0] : vector<1x8x2048xf32> to vector<8x2048xf32>
      %44 = arith.addf %39, %43 : vector<8x2048xf32>
      %c0_20 = arith.constant 0 : index
      %c0_21 = arith.constant 0 : index
      %45 = vector.load %arg6[%c0_20, %c0_21] : memref<8x2048xf32, #tpu.memory_space<vmem>>, vector<8x2048xf32>
      tpu.vector_store %arg6[%c0_20, %c0_21], %44 {strides = array<i32>} : memref<8x2048xf32, #tpu.memory_space<vmem>>, vector<8x2048xf32>,
      %c0_22 = arith.constant 0 : index
      %c0_23 = arith.constant 0 : index
      %46 = vector.load %arg5[%c0_22, %c0_23] : memref<8x2048xf32, #tpu.memory_space<vmem>>, vector<8x2048xf32>
      tpu.vector_store %arg5[%c0_22, %c0_23], %34 {strides = array<i32>} : memref<8x2048xf32, #tpu.memory_space<vmem>>, vector<8x2048xf32>,
    } else {
    }
    %c0_i32_3 = arith.constant 0 : i32
    %6 = arith.cmpi eq, %arg0, %c0_i32_3 : i32
    %7 = arith.extui %6 : i1 to i32
    %c0_i32_4 = arith.constant 0 : i32
    %8 = arith.cmpi ne, %7, %c0_i32_4 : i32
    scf.if %8 {
      %c0 = arith.constant 0 : index
      %c0_7 = arith.constant 0 : index
      %12 = vector.load %arg2[%c0, %c0_7] : memref<8x2048xf32, #tpu.memory_space<vmem>>, vector<8x2048xf32>
      %cst = arith.constant 2.500000e-01 : f32
      %13 = vector.broadcast %cst : f32 to vector<8x2048xf32>
      %14 = arith.subf %12, %13 : vector<8x2048xf32>
      %cst_8 = arith.constant 5.000000e-01 : f32
      %15 = vector.broadcast %cst_8 : f32 to vector<8x2048xf32>
      %16 = arith.addf %14, %15 : vector<8x2048xf32>
      %cst_9 = arith.constant 0.000000e+00 : f32
      %17 = vector.broadcast %cst_9 : f32 to vector<8x2048xf32>
      %18 = arith.maximumf %16, %17 : vector<8x2048xf32>
      %19 = arith.mulf %18, %14 : vector<8x2048xf32>
      %cst_10 = arith.constant 6.400000e+01 : f32
      %20 = vector.broadcast %cst_10 : f32 to vector<8x2048xf32>
      %21 = arith.mulf %19, %20 : vector<8x2048xf32>
      %22 = tpu.iota {dimensions = array<i32: 0>} : vector<8x2048xi32>
      %c2048_i32 = arith.constant 2048 : i32
      %23 = vector.broadcast %c2048_i32 : i32 to vector<8x2048xi32>
      %24 = arith.muli %22, %23 : vector<8x2048xi32>
      %25 = tpu.iota {dimensions = array<i32: 1>} : vector<8x2048xi32>
      %26 = arith.addi %24, %25 : vector<8x2048xi32>
      %c8_i32 = arith.constant 8 : i32
      %27 = vector.broadcast %c8_i32 : i32 to vector<8x2048xi32>
      %28 = arith.cmpi slt, %26, %27 : vector<8x2048xi32>
      %cst_11 = arith.constant -1.000000e+30 : f32
      %29 = vector.broadcast %cst_11 : f32 to vector<8x2048xf32>
      %30 = arith.select %28, %21, %29 : vector<8x2048xi1>, vector<8x2048xf32>
      %31 = vector.shape_cast %30 : vector<8x2048xf32> to vector<1x8x2048xf32>
      %cst_12 = arith.constant dense<0xFF800000> : vector<8x2048xf32>
      %32 = vector.multi_reduction <maximumf>, %31, %cst_12 [0] : vector<1x8x2048xf32> to vector<8x2048xf32>
      %c0_13 = arith.constant 0 : index
      %c0_14 = arith.constant 0 : index
      %33 = vector.load %arg7[%c0_13, %c0_14] : memref<8x2048xf32, #tpu.memory_space<vmem>>, vector<8x2048xf32>
      %34 = arith.maximumf %33, %32 : vector<8x2048xf32>
      %c0_15 = arith.constant 0 : index
      %c0_16 = arith.constant 0 : index
      %35 = vector.load %arg8[%c0_15, %c0_16] : memref<8x2048xf32, #tpu.memory_space<vmem>>, vector<8x2048xf32>
      %c0_17 = arith.constant 0 : index
      %c0_18 = arith.constant 0 : index
      %36 = vector.load %arg7[%c0_17, %c0_18] : memref<8x2048xf32, #tpu.memory_space<vmem>>, vector<8x2048xf32>
      %37 = arith.subf %36, %34 : vector<8x2048xf32>
      %38 = math.exp %37 : vector<8x2048xf32>
      %39 = arith.mulf %35, %38 : vector<8x2048xf32>
      %40 = vector.shape_cast %34 : vector<8x2048xf32> to vector<1x8x2048xf32>
      %41 = arith.subf %31, %40 : vector<1x8x2048xf32>
      %42 = math.exp %41 : vector<1x8x2048xf32>
      %cst_19 = arith.constant dense<0.000000e+00> : vector<8x2048xf32>
      %43 = vector.multi_reduction <add>, %42, %cst_19 [0] : vector<1x8x2048xf32> to vector<8x2048xf32>
      %44 = arith.addf %39, %43 : vector<8x2048xf32>
      %c0_20 = arith.constant 0 : index
      %c0_21 = arith.constant 0 : index
      %45 = vector.load %arg8[%c0_20, %c0_21] : memref<8x2048xf32, #tpu.memory_space<vmem>>, vector<8x2048xf32>
      tpu.vector_store %arg8[%c0_20, %c0_21], %44 {strides = array<i32>} : memref<8x2048xf32, #tpu.memory_space<vmem>>, vector<8x2048xf32>,
      %c0_22 = arith.constant 0 : index
      %c0_23 = arith.constant 0 : index
      %46 = vector.load %arg7[%c0_22, %c0_23] : memref<8x2048xf32, #tpu.memory_space<vmem>>, vector<8x2048xf32>
      tpu.vector_store %arg7[%c0_22, %c0_23], %34 {strides = array<i32>} : memref<8x2048xf32, #tpu.memory_space<vmem>>, vector<8x2048xf32>,
    } else {
    }
    %c0_i32_5 = arith.constant 0 : i32
    %9 = arith.cmpi eq, %arg0, %c0_i32_5 : i32
    %10 = arith.extui %9 : i1 to i32
    %c0_i32_6 = arith.constant 0 : i32
    %11 = arith.cmpi ne, %10, %c0_i32_6 : i32
    scf.if %11 {
      %c0 = arith.constant 0 : index
      %c0_7 = arith.constant 0 : index
      %12 = vector.load %arg5[%c0, %c0_7] : memref<8x2048xf32, #tpu.memory_space<vmem>>, vector<8x2048xf32>
      %13 = vector.shape_cast %12 : vector<8x2048xf32> to vector<1x8x2048xf32>
      %cst = arith.constant dense<0xFF800000> : vector<1xf32>
      %14 = vector.multi_reduction <maximumf>, %13, %cst [1, 2] : vector<1x8x2048xf32> to vector<1xf32>
      %15 = vector.shape_cast %14 : vector<1xf32> to vector<1x1x1xf32>
      %16 = vector.extract %15[0, 0, 0] : f32 from vector<1x1x1xf32>
      %17 = vector.broadcast %16 : f32 to vector<1x1xf32>
      %c0_8 = arith.constant 0 : index
      %c0_9 = arith.constant 0 : index
      %18 = vector.load %arg6[%c0_8, %c0_9] : memref<8x2048xf32, #tpu.memory_space<vmem>>, vector<8x2048xf32>
      %c0_10 = arith.constant 0 : index
      %c0_11 = arith.constant 0 : index
      %19 = vector.load %arg5[%c0_10, %c0_11] : memref<8x2048xf32, #tpu.memory_space<vmem>>, vector<8x2048xf32>
      %20 = vector.broadcast %17 : vector<1x1xf32> to vector<8x2048xf32>
      %21 = arith.subf %19, %20 : vector<8x2048xf32>
      %22 = math.exp %21 : vector<8x2048xf32>
      %23 = arith.mulf %18, %22 : vector<8x2048xf32>
      %24 = vector.shape_cast %23 : vector<8x2048xf32> to vector<1x8x2048xf32>
      %cst_12 = arith.constant dense<0.000000e+00> : vector<1xf32>
      %25 = vector.multi_reduction <add>, %24, %cst_12 [1, 2] : vector<1x8x2048xf32> to vector<1xf32>
      %26 = vector.shape_cast %25 : vector<1xf32> to vector<1x1x1xf32>
      %27 = vector.extract %26[0, 0, 0] : f32 from vector<1x1x1xf32>
      %28 = vector.broadcast %27 : f32 to vector<1x1xf32>
      %29 = math.log %28 : vector<1x1xf32>
      %30 = arith.addf %17, %29 : vector<1x1xf32>
      %c0_13 = arith.constant 0 : index
      %c0_14 = arith.constant 0 : index
      %31 = vector.load %arg3[%c0_13, %c0_14] : memref<1x1xf32, #tpu.memory_space<vmem>>, vector<1x1xf32>
      tpu.vector_store %arg3[%c0_13, %c0_14], %30 {strides = array<i32>} : memref<1x1xf32, #tpu.memory_space<vmem>>, vector<1x1xf32>,
      %c0_15 = arith.constant 0 : index
      %c0_16 = arith.constant 0 : index
      %32 = vector.load %arg7[%c0_15, %c0_16] : memref<8x2048xf32, #tpu.memory_space<vmem>>, vector<8x2048xf32>
      %33 = vector.shape_cast %32 : vector<8x2048xf32> to vector<1x8x2048xf32>
      %cst_17 = arith.constant dense<0xFF800000> : vector<1xf32>
      %34 = vector.multi_reduction <maximumf>, %33, %cst_17 [1, 2] : vector<1x8x2048xf32> to vector<1xf32>
      %35 = vector.shape_cast %34 : vector<1xf32> to vector<1x1x1xf32>
      %36 = vector.extract %35[0, 0, 0] : f32 from vector<1x1x1xf32>
      %37 = vector.broadcast %36 : f32 to vector<1x1xf32>
      %c0_18 = arith.constant 0 : index
      %c0_19 = arith.constant 0 : index
      %38 = vector.load %arg8[%c0_18, %c0_19] : memref<8x2048xf32, #tpu.memory_space<vmem>>, vector<8x2048xf32>
      %c0_20 = arith.constant 0 : index
      %c0_21 = arith.constant 0 : index
      %39 = vector.load %arg7[%c0_20, %c0_21] : memref<8x2048xf32, #tpu.memory_space<vmem>>, vector<8x2048xf32>
      %40 = vector.broadcast %37 : vector<1x1xf32> to vector<8x2048xf32>
      %41 = arith.subf %39, %40 : vector<8x2048xf32>
      %42 = math.exp %41 : vector<8x2048xf32>
      %43 = arith.mulf %38, %42 : vector<8x2048xf32>
      %44 = vector.shape_cast %43 : vector<8x2048xf32> to vector<1x8x2048xf32>
      %cst_22 = arith.constant dense<0.000000e+00> : vector<1xf32>
      %45 = vector.multi_reduction <add>, %44, %cst_22 [1, 2] : vector<1x8x2048xf32> to vector<1xf32>
      %46 = vector.shape_cast %45 : vector<1xf32> to vector<1x1x1xf32>
      %47 = vector.extract %46[0, 0, 0] : f32 from vector<1x1x1xf32>
      %48 = vector.broadcast %47 : f32 to vector<1x1xf32>
      %49 = math.log %48 : vector<1x1xf32>
      %50 = arith.addf %37, %49 : vector<1x1xf32>
      %c0_23 = arith.constant 0 : index
      %c0_24 = arith.constant 0 : index
      %51 = vector.load %arg4[%c0_23, %c0_24] : memref<1x1xf32, #tpu.memory_space<vmem>>, vector<1x1xf32>
      tpu.vector_store %arg4[%c0_23, %c0_24], %50 {strides = array<i32>} : memref<1x1xf32, #tpu.memory_space<vmem>>, vector<1x1xf32>,
    } else {
    }
    return
  }
  func.func @transform_0(%arg0: i32) -> (i32, i32) {
    %c0_i32 = arith.constant 0 : i32
    %c0_i32_0 = arith.constant 0 : i32
    return %arg0, %c0_i32 : i32, i32
  }
  func.func @transform_1(%arg0: i32) -> (i32, i32) {
    %c0_i32 = arith.constant 0 : i32
    %c0_i32_0 = arith.constant 0 : i32
    return %arg0, %c0_i32 : i32, i32
  }
  func.func @transform_2(%arg0: i32) -> (i32, i32) {
    %c0_i32 = arith.constant 0 : i32
    %c0_i32_0 = arith.constant 0 : i32
    %c0_i32_1 = arith.constant 0 : i32
    return %c0_i32, %c0_i32_0 : i32, i32
  }
  func.func @transform_3(%arg0: i32) -> (i32, i32) {
    %c0_i32 = arith.constant 0 : i32
    %c0_i32_0 = arith.constant 0 : i32
    %c0_i32_1 = arith.constant 0 : i32
    return %c0_i32, %c0_i32_0 : i32, i32
  }
}

</mosaic_0001>

<llo_original>
// kernel: tpu_custom_call.1
$region0: #{tpu_custom_call.1}
  #allocation0 [shape = 'u32[]', space=smem, size = 0x4, offset = 0x4, fixed_abs, tag = 'smem constant byte address 0x4 - core index']
  #allocation1 [shape = 'u32[144,128]{1,0:T(1,128)}', space=vmem, size = 0x12000, scoped, tag = 'internal scratch']
  #allocation2 [shape = 'f32[8,2048]{1,0:T(8,128)}', space=vmem, size = 0x10000, scoped, tag = 'scratch operand']
  #allocation3 [shape = 'f32[8,2048]{1,0:T(8,128)}', space=vmem, size = 0x10000, scoped, tag = 'scratch operand']
  #allocation4 [shape = 'f32[8,2048]{1,0:T(8,128)}', space=vmem, size = 0x10000, scoped, tag = 'scratch operand']
  #allocation5 [shape = 'f32[8,2048]{1,0:T(8,128)}', space=vmem, size = 0x10000, scoped, tag = 'scratch operand']
  %s0 = inlined_call_operand.hbm [shape: f32[8,2048], index: 0, kind: input, shape index: {}]
  %s1 = inlined_call_operand.hbm [shape: f32[8,2048], index: 1, kind: input, shape index: {}]
  %s2 = inlined_call_operand.hbm [shape: f32[1,1], index: 2, kind: output, shape index: {0}]
  %s3 = inlined_call_operand.hbm [shape: f32[1,1], index: 3, kind: output, shape index: {1}]
  %4 = xla_tuple %s2, %s3
  %s5 = sld [smem:[#allocation0]]
  $region38: #{tpu_custom_call.1} parent=0
    _
  %s7 = ssub.s32 1, %s5
  %s8 = scalar_select 0, %s7, %s5
  $region1: #{tpu_custom_call.1} parent=0
    #allocation6 [shape = 'u8[65536]{0}', space=vmem, size = 0x10000, scoped, tag = 'input window, operand 0, single buffered']
    #allocation7 [shape = 's32[1]{0}', space=sflag, size = 0x4, scoped, tag = 'scoped memory for tpu_custom_call.1']
    #allocation8 [shape = 's32[1]{0}', space=sflag, size = 0x4, scoped, tag = 'scoped memory for tpu_custom_call.1']
    #allocation9 [shape = 'u8[65536]{0}', space=vmem, size = 0x10000, scoped, tag = 'input window, operand 1, single buffered']
    #allocation10 [shape = 's32[1]{0}', space=sflag, size = 0x4, scoped, tag = 'scoped memory for tpu_custom_call.1']
    #allocation11 [shape = 'u8[512]{0}', space=vmem, size = 0x400, scoped, tag = 'output window, operand 0, single buffered']
    #allocation12 [shape = 'u8[512]{0}', space=vmem, size = 0x400, scoped, tag = 'output window, operand 1, single buffered']
    #allocation13 [shape = 's32[1]{0}', space=sflag, size = 0x4, scoped, tag = 'scoped memory for tpu_custom_call.1']
    %9 = vsyncpa [#allocation7], 0
    %10 = vsyncpa [#allocation10], 0
    %11 = vsyncpa [#allocation8], 0
    %12 = vsyncpa [#allocation13], 0
    // Predicated region
    $region2: #{tpu_custom_call.1} parent=1 // pred_check
      _
    $region3: #{tpu_custom_call.1} parent=1 // pred_check_branch
      %14 = sbr.rel (0) target = $region5
    $region4: #{tpu_custom_call.1} parent=1 // pred_region
      %s16 = ssub.s32 2048, 2048
      %17 = vsyncadd [#allocation7], %s16
      %s19 = sshll.u32 [#allocation6], 4
      %s20 = int_to_ptr.vmem [resolvable:$true] %s19
      %22 = dma.hbm_to_vmem [thread:$0]  %s0, 2048, %s20, [#allocation7]
    $region5: #{tpu_custom_call.1} parent=1 // pred_fallthru
      _
    // Predicated region
    $region6: #{tpu_custom_call.1} parent=1 // pred_check
      _
    $region7: #{tpu_custom_call.1} parent=1 // pred_check_branch
      %24 = sbr.rel (0) target = $region9
    $region8: #{tpu_custom_call.1} parent=1 // pred_region
      %s26 = ssub.s32 2048, 2048
      %27 = vsyncadd [#allocation10], %s26
      %s29 = sshll.u32 [#allocation9], 4
      %s30 = int_to_ptr.vmem [resolvable:$true] %s29
      %32 = dma.hbm_to_vmem [thread:$0]  %s1, 2048, %s30, [#allocation10]
    $region9: #{tpu_custom_call.1} parent=1 // pred_fallthru
      _
    // Predicated region
    $region10: #{tpu_custom_call.1} parent=1 // pred_check
      _
    $region11: #{tpu_custom_call.1} parent=1 // pred_check_branch
      %34 = sbr.rel (0) target = $region13
    $region12: #{tpu_custom_call.1} parent=1 // pred_region
      %35 = dma.done [#allocation7], 2048
    $region13: #{tpu_custom_call.1} parent=1 // pred_fallthru
      _
    // Predicated region
    $region14: #{tpu_custom_call.1} parent=1 // pred_check
      _
    $region15: #{tpu_custom_call.1} parent=1 // pred_check_branch
      %37 = sbr.rel (0) target = $region17
    $region16: #{tpu_custom_call.1} parent=1 // pred_region
      %38 = dma.done [#allocation10], 2048
    $region17: #{tpu_custom_call.1} parent=1 // pred_fallthru
      _
    %p39 = scmp.eq.s32.totalorder 0, 0
    // Predicated region
    $region18: #{tpu_custom_call.1} parent=1 // pred_check
      %p40 = pneg %p39
    $region19: #{tpu_custom_call.1} parent=1 // pred_check_branch
      %42 = sbr.rel (%p40) target = $region21
    $region20: #{tpu_custom_call.1} parent=1 // pred_region
      %43 = vst [vmem:[#allocation2] sm:$0xff] -1e+30
      %44 = vst [vmem:[#allocation2 + $0x8] sm:$0xff] -1e+30
      %45 = vst [vmem:[#allocation2 + $0x10] sm:$0xff] -1e+30
      %46 = vst [vmem:[#allocation2 + $0x18] sm:$0xff] -1e+30
      %47 = vst [vmem:[#allocation2 + $0x20] sm:$0xff] -1e+30
      %48 = vst [vmem:[#allocation2 + $0x28] sm:$0xff] -1e+30
      %49 = vst [vmem:[#allocation2 + $0x30] sm:$0xff] -1e+30
      %50 = vst [vmem:[#allocation2 + $0x38] sm:$0xff] -1e+30
      %51 = vst [vmem:[#allocation2 + $0x40] sm:$0xff] -1e+30
      %52 = vst [vmem:[#allocation2 + $0x48] sm:$0xff] -1e+30
      %53 = vst [vmem:[#allocation2 + $0x50] sm:$0xff] -1e+30
      %54 = vst [vmem:[#allocation2 + $0x58] sm:$0xff] -1e+30
      %55 = vst [vmem:[#allocation2 + $0x60] sm:$0xff] -1e+30
      %56 = vst [vmem:[#allocation2 + $0x68] sm:$0xff] -1e+30
      %57 = vst [vmem:[#allocation2 + $0x70] sm:$0xff] -1e+30
      %58 = vst [vmem:[#allocation2 + $0x78] sm:$0xff] -1e+30
      %59 = vst [vmem:[#allocation4] sm:$0xff] -1e+30
      %60 = vst [vmem:[#allocation4 + $0x8] sm:$0xff] -1e+30
      %61 = vst [vmem:[#allocation4 + $0x10] sm:$0xff] -1e+30
      %62 = vst [vmem:[#allocation4 + $0x18] sm:$0xff] -1e+30
      %63 = vst [vmem:[#allocation4 + $0x20] sm:$0xff] -1e+30
      %64 = vst [vmem:[#allocation4 + $0x28] sm:$0xff] -1e+30
      %65 = vst [vmem:[#allocation4 + $0x30] sm:$0xff] -1e+30
      %66 = vst [vmem:[#allocation4 + $0x38] sm:$0xff] -1e+30
      %67 = vst [vmem:[#allocation4 + $0x40] sm:$0xff] -1e+30
      %68 = vst [vmem:[#allocation4 + $0x48] sm:$0xff] -1e+30
      %69 = vst [vmem:[#allocation4 + $0x50] sm:$0xff] -1e+30
      %70 = vst [vmem:[#allocation4 + $0x58] sm:$0xff] -1e+30
      %71 = vst [vmem:[#allocation4 + $0x60] sm:$0xff] -1e+30
      %72 = vst [vmem:[#allocation4 + $0x68] sm:$0xff] -1e+30
      %73 = vst [vmem:[#allocation4 + $0x70] sm:$0xff] -1e+30
      %74 = vst [vmem:[#allocation4 + $0x78] sm:$0xff] -1e+30
      %75 = vst [vmem:[#allocation3] sm:$0xff] 0.0
      %76 = vst [vmem:[#allocation3 + $0x8] sm:$0xff] 0.0
      %77 = vst [vmem:[#allocation3 + $0x10] sm:$0xff] 0.0
      %78 = vst [vmem:[#allocation3 + $0x18] sm:$0xff] 0.0
      %79 = vst [vmem:[#allocation3 + $0x20] sm:$0xff] 0.0
      %80 = vst [vmem:[#allocation3 + $0x28] sm:$0xff] 0.0
      %81 = vst [vmem:[#allocation3 + $0x30] sm:$0xff] 0.0
      %82 = vst [vmem:[#allocation3 + $0x38] sm:$0xff] 0.0
      %83 = vst [vmem:[#allocation3 + $0x40] sm:$0xff] 0.0
      %84 = vst [vmem:[#allocation3 + $0x48] sm:$0xff] 0.0
      %85 = vst [vmem:[#allocation3 + $0x50] sm:$0xff] 0.0
      %86 = vst [vmem:[#allocation3 + $0x58] sm:$0xff] 0.0
      %87 = vst [vmem:[#allocation3 + $0x60] sm:$0xff] 0.0
      %88 = vst [vmem:[#allocation3 + $0x68] sm:$0xff] 0.0
      %89 = vst [vmem:[#allocation3 + $0x70] sm:$0xff] 0.0
      %90 = vst [vmem:[#allocation3 + $0x78] sm:$0xff] 0.0
      %91 = vst [vmem:[#allocation5] sm:$0xff] 0.0
      %92 = vst [vmem:[#allocation5 + $0x8] sm:$0xff] 0.0
      %93 = vst [vmem:[#allocation5 + $0x10] sm:$0xff] 0.0
      %94 = vst [vmem:[#allocation5 + $0x18] sm:$0xff] 0.0
      %95 = vst [vmem:[#allocation5 + $0x20] sm:$0xff] 0.0
      %96 = vst [vmem:[#allocation5 + $0x28] sm:$0xff] 0.0
      %97 = vst [vmem:[#allocation5 + $0x30] sm:$0xff] 0.0
      %98 = vst [vmem:[#allocation5 + $0x38] sm:$0xff] 0.0
      %99 = vst [vmem:[#allocation5 + $0x40] sm:$0xff] 0.0
      %100 = vst [vmem:[#allocation5 + $0x48] sm:$0xff] 0.0
      %101 = vst [vmem:[#allocation5 + $0x50] sm:$0xff] 0.0
      %102 = vst [vmem:[#allocation5 + $0x58] sm:$0xff] 0.0
      %103 = vst [vmem:[#allocation5 + $0x60] sm:$0xff] 0.0
      %104 = vst [vmem:[#allocation5 + $0x68] sm:$0xff] 0.0
      %105 = vst [vmem:[#allocation5 + $0x70] sm:$0xff] 0.0
      %106 = vst [vmem:[#allocation5 + $0x78] sm:$0xff] 0.0
      %v107 = vld [vmem:[#allocation6] sm:$0xff]
      %v108 = vld [vmem:[#allocation6 + $0x8] sm:$0xff]
      %v109 = vld [vmem:[#allocation6 + $0x10] sm:$0xff]
      %v110 = vld [vmem:[#allocation6 + $0x18] sm:$0xff]
      %v111 = vld [vmem:[#allocation6 + $0x20] sm:$0xff]
      %v112 = vld [vmem:[#allocation6 + $0x28] sm:$0xff]
      %v113 = vld [vmem:[#allocation6 + $0x30] sm:$0xff]
      %v114 = vld [vmem:[#allocation6 + $0x38] sm:$0xff]
      %v115 = vld [vmem:[#allocation6 + $0x40] sm:$0xff]
      %v116 = vld [vmem:[#allocation6 + $0x48] sm:$0xff]
      %v117 = vld [vmem:[#allocation6 + $0x50] sm:$0xff]
      %v118 = vld [vmem:[#allocation6 + $0x58] sm:$0xff]
      %v119 = vld [vmem:[#allocation6 + $0x60] sm:$0xff]
      %v120 = vld [vmem:[#allocation6 + $0x68] sm:$0xff]
      %v121 = vld [vmem:[#allocation6 + $0x70] sm:$0xff]
      %v122 = vld [vmem:[#allocation6 + $0x78] sm:$0xff]
      %v123 = vsub.f32 0.75, %v107
      %v124 = vsub.f32 0.75, %v108
      %v125 = vsub.f32 0.75, %v109
      %v126 = vsub.f32 0.75, %v110
      %v127 = vsub.f32 0.75, %v111
      %v128 = vsub.f32 0.75, %v112
      %v129 = vsub.f32 0.75, %v113
      %v130 = vsub.f32 0.75, %v114
      %v131 = vsub.f32 0.75, %v115
      %v132 = vsub.f32 0.75, %v116
      %v133 = vsub.f32 0.75, %v117
      %v134 = vsub.f32 0.75, %v118
      %v135 = vsub.f32 0.75, %v119
      %v136 = vsub.f32 0.75, %v120
      %v137 = vsub.f32 0.75, %v121
      %v138 = vsub.f32 0.75, %v122
      %v139 = vadd.f32 %v123, 0.5
      %v140 = vadd.f32 %v124, 0.5
      %v141 = vadd.f32 %v125, 0.5
      %v142 = vadd.f32 %v126, 0.5
      %v143 = vadd.f32 %v127, 0.5
      %v144 = vadd.f32 %v128, 0.5
      %v145 = vadd.f32 %v129, 0.5
      %v146 = vadd.f32 %v130, 0.5
      %v147 = vadd.f32 %v131, 0.5
      %v148 = vadd.f32 %v132, 0.5
      %v149 = vadd.f32 %v133, 0.5
      %v150 = vadd.f32 %v134, 0.5
      %v151 = vadd.f32 %v135, 0.5
      %v152 = vadd.f32 %v136, 0.5
      %v153 = vadd.f32 %v137, 0.5
      %v154 = vadd.f32 %v138, 0.5
      %v155 = vmax.f32 %v139, 0.0
      %v156 = vmax.f32 %v140, 0.0
      %v157 = vmax.f32 %v141, 0.0
      %v158 = vmax.f32 %v142, 0.0
      %v159 = vmax.f32 %v143, 0.0
      %v160 = vmax.f32 %v144, 0.0
      %v161 = vmax.f32 %v145, 0.0
      %v162 = vmax.f32 %v146, 0.0
      %v163 = vmax.f32 %v147, 0.0
      %v164 = vmax.f32 %v148, 0.0
      %v165 = vmax.f32 %v149, 0.0
      %v166 = vmax.f32 %v150, 0.0
      %v167 = vmax.f32 %v151, 0.0
      %v168 = vmax.f32 %v152, 0.0
      %v169 = vmax.f32 %v153, 0.0
      %v170 = vmax.f32 %v154, 0.0
      %v171 = vmul.f32 %v155, %v123
      %v172 = vmul.f32 %v156, %v124
      %v173 = vmul.f32 %v157, %v125
      %v174 = vmul.f32 %v158, %v126
      %v175 = vmul.f32 %v159, %v127
      %v176 = vmul.f32 %v160, %v128
      %v177 = vmul.f32 %v161, %v129
      %v178 = vmul.f32 %v162, %v130
      %v179 = vmul.f32 %v163, %v131
      %v180 = vmul.f32 %v164, %v132
      %v181 = vmul.f32 %v165, %v133
      %v182 = vmul.f32 %v166, %v134
      %v183 = vmul.f32 %v167, %v135
      %v184 = vmul.f32 %v168, %v136
      %v185 = vmul.f32 %v169, %v137
      %v186 = vmul.f32 %v170, %v138
      %v187 = vmul.f32 %v171, 64.0
      %v188 = vmul.f32 %v172, 64.0
      %v189 = vmul.f32 %v173, 64.0
      %v190 = vmul.f32 %v174, 64.0
      %v191 = vmul.f32 %v175, 64.0
      %v192 = vmul.f32 %v176, 64.0
      %v193 = vmul.f32 %v177, 64.0
      %v194 = vmul.f32 %v178, 64.0
      %v195 = vmul.f32 %v179, 64.0
      %v196 = vmul.f32 %v180, 64.0
      %v197 = vmul.f32 %v181, 64.0
      %v198 = vmul.f32 %v182, 64.0
      %v199 = vmul.f32 %v183, 64.0
      %v200 = vmul.f32 %v184, 64.0
      %v201 = vmul.f32 %v185, 64.0
      %v202 = vmul.f32 %v186, 64.0
      %v203 = vlaneseq
      %v204 = vshrl.u32 %v203, 7
      %v205 = vmul.u32 %v204, 2048
      %v206 = vlaneseq
      %v207 = vand.u32 %v206, 127
      %v208 = vadd.s32 %v207, 128
      %v209 = vadd.s32 %v207, 256
      %v210 = vadd.s32 %v207, 384
      %v211 = vadd.s32 %v207, 512
      %v212 = vadd.s32 %v207, 640
      %v213 = vadd.s32 %v207, 768
      %v214 = vadd.s32 %v207, 896
      %v215 = vadd.s32 %v207, 1024
      %v216 = vadd.s32 %v207, 1152
      %v217 = vadd.s32 %v207, 1280
      %v218 = vadd.s32 %v207, 1408
      %v219 = vadd.s32 %v207, 1536
      %v220 = vadd.s32 %v207, 1664
      %v221 = vadd.s32 %v207, 1792
      %v222 = vadd.s32 %v207, 1920
      %v223 = vadd.s32 %v205, %v207
      %v224 = vadd.s32 %v205, %v208
      %v225 = vadd.s32 %v205, %v209
      %v226 = vadd.s32 %v205, %v210
      %v227 = vadd.s32 %v205, %v211
      %v228 = vadd.s32 %v205, %v212
      %v229 = vadd.s32 %v205, %v213
      %v230 = vadd.s32 %v205, %v214
      %v231 = vadd.s32 %v205, %v215
      %v232 = vadd.s32 %v205, %v216
      %v233 = vadd.s32 %v205, %v217
      %v234 = vadd.s32 %v205, %v218
      %v235 = vadd.s32 %v205, %v219
      %v236 = vadd.s32 %v205, %v220
      %v237 = vadd.s32 %v205, %v221
      %v238 = vadd.s32 %v205, %v222
      %vm239 = vcmp.lt.s32.totalorder %v223, 8
      %vm240 = vcmp.lt.s32.totalorder %v224, 8
      %vm241 = vcmp.lt.s32.totalorder %v225, 8
      %vm242 = vcmp.lt.s32.totalorder %v226, 8
      %vm243 = vcmp.lt.s32.totalorder %v227, 8
      %vm244 = vcmp.lt.s32.totalorder %v228, 8
      %vm245 = vcmp.lt.s32.totalorder %v229, 8
      %vm246 = vcmp.lt.s32.totalorder %v230, 8
      %vm247 = vcmp.lt.s32.totalorder %v231, 8
      %vm248 = vcmp.lt.s32.totalorder %v232, 8
      %vm249 = vcmp.lt.s32.totalorder %v233, 8
      %vm250 = vcmp.lt.s32.totalorder %v234, 8
      %vm251 = vcmp.lt.s32.totalorder %v235, 8
      %vm252 = vcmp.lt.s32.totalorder %v236, 8
      %vm253 = vcmp.lt.s32.totalorder %v237, 8
      %vm254 = vcmp.lt.s32.totalorder %v238, 8
      %v255 = vsel %vm239, %v187, -1e+30
      %v256 = vsel %vm240, %v188, -1e+30
      %v257 = vsel %vm241, %v189, -1e+30
      %v258 = vsel %vm242, %v190, -1e+30
      %v259 = vsel %vm243, %v191, -1e+30
      %v260 = vsel %vm244, %v192, -1e+30
      %v261 = vsel %vm245, %v193, -1e+30
      %v262 = vsel %vm246, %v194, -1e+30
      %v263 = vsel %vm247, %v195, -1e+30
      %v264 = vsel %vm248, %v196, -1e+30
      %v265 = vsel %vm249, %v197, -1e+30
      %v266 = vsel %vm250, %v198, -1e+30
      %v267 = vsel %vm251, %v199, -1e+30
      %v268 = vsel %vm252, %v200, -1e+30
      %v269 = vsel %vm253, %v201, -1e+30
      %v270 = vsel %vm254, %v202, -1e+30
      %v271 = vld [vmem:[#allocation2] sm:$0xff]
      %v272 = vld [vmem:[#allocation2 + $0x8] sm:$0xff]
      %v273 = vld [vmem:[#allocation2 + $0x10] sm:$0xff]
      %v274 = vld [vmem:[#allocation2 + $0x18] sm:$0xff]
      %v275 = vld [vmem:[#allocation2 + $0x20] sm:$0xff]
      %v276 = vld [vmem:[#allocation2 + $0x28] sm:$0xff]
      %v277 = vld [vmem:[#allocation2 + $0x30] sm:$0xff]
      %v278 = vld [vmem:[#allocation2 + $0x38] sm:$0xff]
      %v279 = vld [vmem:[#allocation2 + $0x40] sm:$0xff]
      %v280 = vld [vmem:[#allocation2 + $0x48] sm:$0xff]
      %v281 = vld [vmem:[#allocation2 + $0x50] sm:$0xff]
      %v282 = vld [vmem:[#allocation2 + $0x58] sm:$0xff]
      %v283 = vld [vmem:[#allocation2 + $0x60] sm:$0xff]
      %v284 = vld [vmem:[#allocation2 + $0x68] sm:$0xff]
      %v285 = vld [vmem:[#allocation2 + $0x70] sm:$0xff]
      %v286 = vld [vmem:[#allocation2 + $0x78] sm:$0xff]
      %v287 = vmax.f32 %v271, %v255
      %v288 = vmax.f32 %v272, %v256
      %v289 = vmax.f32 %v273, %v257
      %v290 = vmax.f32 %v274, %v258
      %v291 = vmax.f32 %v275, %v259
      %v292 = vmax.f32 %v276, %v260
      %v293 = vmax.f32 %v277, %v261
      %v294 = vmax.f32 %v278, %v262
      %v295 = vmax.f32 %v279, %v263
      %v296 = vmax.f32 %v280, %v264
      %v297 = vmax.f32 %v281, %v265
      %v298 = vmax.f32 %v282, %v266
      %v299 = vmax.f32 %v283, %v267
      %v300 = vmax.f32 %v284, %v268
      %v301 = vmax.f32 %v285, %v269
      %v302 = vmax.f32 %v286, %v270
      %v303 = vld [vmem:[#allocation3] sm:$0xff]
      %v304 = vld [vmem:[#allocation3 + $0x8] sm:$0xff]
      %v305 = vld [vmem:[#allocation3 + $0x10] sm:$0xff]
      %v306 = vld [vmem:[#allocation3 + $0x18] sm:$0xff]
      %v307 = vld [vmem:[#allocation3 + $0x20] sm:$0xff]
      %v308 = vld [vmem:[#allocation3 + $0x28] sm:$0xff]
      %v309 = vld [vmem:[#allocation3 + $0x30] sm:$0xff]
      %v310 = vld [vmem:[#allocation3 + $0x38] sm:$0xff]
      %v311 = vld [vmem:[#allocation3 + $0x40] sm:$0xff]
      %v312 = vld [vmem:[#allocation3 + $0x48] sm:$0xff]
      %v313 = vld [vmem:[#allocation3 + $0x50] sm:$0xff]
      %v314 = vld [vmem:[#allocation3 + $0x58] sm:$0xff]
      %v315 = vld [vmem:[#allocation3 + $0x60] sm:$0xff]
      %v316 = vld [vmem:[#allocation3 + $0x68] sm:$0xff]
      %v317 = vld [vmem:[#allocation3 + $0x70] sm:$0xff]
      %v318 = vld [vmem:[#allocation3 + $0x78] sm:$0xff]
      %v319 = vsub.f32 %v271, %v287
      %v320 = vsub.f32 %v272, %v288
      %v321 = vsub.f32 %v273, %v289
      %v322 = vsub.f32 %v274, %v290
      %v323 = vsub.f32 %v275, %v291
      %v324 = vsub.f32 %v276, %v292
      %v325 = vsub.f32 %v277, %v293
      %v326 = vsub.f32 %v278, %v294
      %v327 = vsub.f32 %v279, %v295
      %v328 = vsub.f32 %v280, %v296
      %v329 = vsub.f32 %v281, %v297
      %v330 = vsub.f32 %v282, %v298
      %v331 = vsub.f32 %v283, %v299
      %v332 = vsub.f32 %v284, %v300
      %v333 = vsub.f32 %v285, %v301
      %v334 = vsub.f32 %v286, %v302
      %v335 = vmul.f32 %v319, 1.442695
      %v336 = vpow.pop %v335
      %v337 = vmul.f32 %v320, 1.442695
      %v338 = vpow.pop %v337
      %v339 = vmul.f32 %v321, 1.442695
      %v340 = vpow.pop %v339
      %v341 = vmul.f32 %v322, 1.442695
      %v342 = vpow.pop %v341
      %v343 = vmul.f32 %v323, 1.442695
      %v344 = vpow.pop %v343
      %v345 = vmul.f32 %v324, 1.442695
      %v346 = vpow.pop %v345
      %v347 = vmul.f32 %v325, 1.442695
      %v348 = vpow.pop %v347
      %v349 = vmul.f32 %v326, 1.442695
      %v350 = vpow.pop %v349
      %v351 = vmul.f32 %v327, 1.442695
      %v352 = vpow.pop %v351
      %v353 = vmul.f32 %v328, 1.442695
      %v354 = vpow.pop %v353
      %v355 = vmul.f32 %v329, 1.442695
      %v356 = vpow.pop %v355
      %v357 = vmul.f32 %v330, 1.442695
      %v358 = vpow.pop %v357
      %v359 = vmul.f32 %v331, 1.442695
      %v360 = vpow.pop %v359
      %v361 = vmul.f32 %v332, 1.442695
      %v362 = vpow.pop %v361
      %v363 = vmul.f32 %v333, 1.442695
      %v364 = vpow.pop %v363
      %v365 = vmul.f32 %v334, 1.442695
      %v366 = vpow.pop %v365
      %v367 = vmul.f32 %v303, %v336
      %v368 = vmul.f32 %v304, %v338
      %v369 = vmul.f32 %v305, %v340
      %v370 = vmul.f32 %v306, %v342
      %v371 = vmul.f32 %v307, %v344
      %v372 = vmul.f32 %v308, %v346
      %v373 = vmul.f32 %v309, %v348
      %v374 = vmul.f32 %v310, %v350
      %v375 = vmul.f32 %v311, %v352
      %v376 = vmul.f32 %v312, %v354
      %v377 = vmul.f32 %v313, %v356
      %v378 = vmul.f32 %v314, %v358
      %v379 = vmul.f32 %v315, %v360
      %v380 = vmul.f32 %v316, %v362
      %v381 = vmul.f32 %v317, %v364
      %v382 = vmul.f32 %v318, %v366
      %v383 = vsub.f32 %v255, %v287
      %v384 = vsub.f32 %v256, %v288
      %v385 = vsub.f32 %v257, %v289
      %v386 = vsub.f32 %v258, %v290
      %v387 = vsub.f32 %v259, %v291
      %v388 = vsub.f32 %v260, %v292
      %v389 = vsub.f32 %v261, %v293
      %v390 = vsub.f32 %v262, %v294
      %v391 = vsub.f32 %v263, %v295
      %v392 = vsub.f32 %v264, %v296
      %v393 = vsub.f32 %v265, %v297
      %v394 = vsub.f32 %v266, %v298
      %v395 = vsub.f32 %v267, %v299
      %v396 = vsub.f32 %v268, %v300
      %v397 = vsub.f32 %v269, %v301
      %v398 = vsub.f32 %v270, %v302
      %v399 = vmul.f32 %v383, 1.442695
      %v400 = vpow.pop %v399
      %v401 = vmul.f32 %v384, 1.442695
      %v402 = vpow.pop %v401
      %v403 = vmul.f32 %v385, 1.442695
      %v404 = vpow.pop %v403
      %v405 = vmul.f32 %v386, 1.442695
      %v406 = vpow.pop %v405
      %v407 = vmul.f32 %v387, 1.442695
      %v408 = vpow.pop %v407
      %v409 = vmul.f32 %v388, 1.442695
      %v410 = vpow.pop %v409
      %v411 = vmul.f32 %v389, 1.442695
      %v412 = vpow.pop %v411
      %v413 = vmul.f32 %v390, 1.442695
      %v414 = vpow.pop %v413
      %v415 = vmul.f32 %v391, 1.442695
      %v416 = vpow.pop %v415
      %v417 = vmul.f32 %v392, 1.442695
      %v418 = vpow.pop %v417
      %v419 = vmul.f32 %v393, 1.442695
      %v420 = vpow.pop %v419
      %v421 = vmul.f32 %v394, 1.442695
      %v422 = vpow.pop %v421
      %v423 = vmul.f32 %v395, 1.442695
      %v424 = vpow.pop %v423
      %v425 = vmul.f32 %v396, 1.442695
      %v426 = vpow.pop %v425
      %v427 = vmul.f32 %v397, 1.442695
      %v428 = vpow.pop %v427
      %v429 = vmul.f32 %v398, 1.442695
      %v430 = vpow.pop %v429
      %v431 = vadd.f32 %v400, 0.0
      %v432 = vadd.f32 %v402, 0.0
      %v433 = vadd.f32 %v404, 0.0
      %v434 = vadd.f32 %v406, 0.0
      %v435 = vadd.f32 %v408, 0.0
      %v436 = vadd.f32 %v410, 0.0
      %v437 = vadd.f32 %v412, 0.0
      %v438 = vadd.f32 %v414, 0.0
      %v439 = vadd.f32 %v416, 0.0
      %v440 = vadd.f32 %v418, 0.0
      %v441 = vadd.f32 %v420, 0.0
      %v442 = vadd.f32 %v422, 0.0
      %v443 = vadd.f32 %v424, 0.0
      %v444 = vadd.f32 %v426, 0.0
      %v445 = vadd.f32 %v428, 0.0
      %v446 = vadd.f32 %v430, 0.0
      %v447 = vadd.f32 %v367, %v431
      %v448 = vadd.f32 %v368, %v432
      %v449 = vadd.f32 %v369, %v433
      %v450 = vadd.f32 %v370, %v434
      %v451 = vadd.f32 %v371, %v435
      %v452 = vadd.f32 %v372, %v436
      %v453 = vadd.f32 %v373, %v437
      %v454 = vadd.f32 %v374, %v438
      %v455 = vadd.f32 %v375, %v439
      %v456 = vadd.f32 %v376, %v440
      %v457 = vadd.f32 %v377, %v441
      %v458 = vadd.f32 %v378, %v442
      %v459 = vadd.f32 %v379, %v443
      %v460 = vadd.f32 %v380, %v444
      %v461 = vadd.f32 %v381, %v445
      %v462 = vadd.f32 %v382, %v446
      %463 = vst [vmem:[#allocation3] sm:$0xff] %v447
      %464 = vst [vmem:[#allocation3 + $0x8] sm:$0xff] %v448
      %465 = vst [vmem:[#allocation3 + $0x10] sm:$0xff] %v449
      %466 = vst [vmem:[#allocation3 + $0x18] sm:$0xff] %v450
      %467 = vst [vmem:[#allocation3 + $0x20] sm:$0xff] %v451
      %468 = vst [vmem:[#allocation3 + $0x28] sm:$0xff] %v452
      %469 = vst [vmem:[#allocation3 + $0x30] sm:$0xff] %v453
      %470 = vst [vmem:[#allocation3 + $0x38] sm:$0xff] %v454
      %471 = vst [vmem:[#allocation3 + $0x40] sm:$0xff] %v455
      %472 = vst [vmem:[#allocation3 + $0x48] sm:$0xff] %v456
      %473 = vst [vmem:[#allocation3 + $0x50] sm:$0xff] %v457
      %474 = vst [vmem:[#allocation3 + $0x58] sm:$0xff] %v458
      %475 = vst [vmem:[#allocation3 + $0x60] sm:$0xff] %v459
      %476 = vst [vmem:[#allocation3 + $0x68] sm:$0xff] %v460
      %477 = vst [vmem:[#allocation3 + $0x70] sm:$0xff] %v461
      %478 = vst [vmem:[#allocation3 + $0x78] sm:$0xff] %v462
      %479 = vst [vmem:[#allocation2] sm:$0xff] %v287
      %480 = vst [vmem:[#allocation2 + $0x8] sm:$0xff] %v288
      %481 = vst [vmem:[#allocation2 + $0x10] sm:$0xff] %v289
      %482 = vst [vmem:[#allocation2 + $0x18] sm:$0xff] %v290
      %483 = vst [vmem:[#allocation2 + $0x20] sm:$0xff] %v291
      %484 = vst [vmem:[#allocation2 + $0x28] sm:$0xff] %v292
      %485 = vst [vmem:[#allocation2 + $0x30] sm:$0xff] %v293
      %486 = vst [vmem:[#allocation2 + $0x38] sm:$0xff] %v294
      %487 = vst [vmem:[#allocation2 + $0x40] sm:$0xff] %v295
      %488 = vst [vmem:[#allocation2 + $0x48] sm:$0xff] %v296
      %489 = vst [vmem:[#allocation2 + $0x50] sm:$0xff] %v297
      %490 = vst [vmem:[#allocation2 + $0x58] sm:$0xff] %v298
      %491 = vst [vmem:[#allocation2 + $0x60] sm:$0xff] %v299
      %492 = vst [vmem:[#allocation2 + $0x68] sm:$0xff] %v300
      %493 = vst [vmem:[#allocation2 + $0x70] sm:$0xff] %v301
      %494 = vst [vmem:[#allocation2 + $0x78] sm:$0xff] %v302
      %v495 = vld [vmem:[#allocation9] sm:$0xff]
      %v496 = vld [vmem:[#allocation9 + $0x8] sm:$0xff]
      %v497 = vld [vmem:[#allocation9 + $0x10] sm:$0xff]
      %v498 = vld [vmem:[#allocation9 + $0x18] sm:$0xff]
      %v499 = vld [vmem:[#allocation9 + $0x20] sm:$0xff]
      %v500 = vld [vmem:[#allocation9 + $0x28] sm:$0xff]
      %v501 = vld [vmem:[#allocation9 + $0x30] sm:$0xff]
      %v502 = vld [vmem:[#allocation9 + $0x38] sm:$0xff]
      %v503 = vld [vmem:[#allocation9 + $0x40] sm:$0xff]
      %v504 = vld [vmem:[#allocation9 + $0x48] sm:$0xff]
      %v505 = vld [vmem:[#allocation9 + $0x50] sm:$0xff]
      %v506 = vld [vmem:[#allocation9 + $0x58] sm:$0xff]
      %v507 = vld [vmem:[#allocation9 + $0x60] sm:$0xff]
      %v508 = vld [vmem:[#allocation9 + $0x68] sm:$0xff]
      %v509 = vld [vmem:[#allocation9 + $0x70] sm:$0xff]
      %v510 = vld [vmem:[#allocation9 + $0x78] sm:$0xff]
      %v511 = vsub.f32 %v495, 0.25
      %v512 = vsub.f32 %v496, 0.25
      %v513 = vsub.f32 %v497, 0.25
      %v514 = vsub.f32 %v498, 0.25
      %v515 = vsub.f32 %v499, 0.25
      %v516 = vsub.f32 %v500, 0.25
      %v517 = vsub.f32 %v501, 0.25
      %v518 = vsub.f32 %v502, 0.25
      %v519 = vsub.f32 %v503, 0.25
      %v520 = vsub.f32 %v504, 0.25
      %v521 = vsub.f32 %v505, 0.25
      %v522 = vsub.f32 %v506, 0.25
      %v523 = vsub.f32 %v507, 0.25
      %v524 = vsub.f32 %v508, 0.25
      %v525 = vsub.f32 %v509, 0.25
      %v526 = vsub.f32 %v510, 0.25
      %v527 = vadd.f32 %v511, 0.5
      %v528 = vadd.f32 %v512, 0.5
      %v529 = vadd.f32 %v513, 0.5
      %v530 = vadd.f32 %v514, 0.5
      %v531 = vadd.f32 %v515, 0.5
      %v532 = vadd.f32 %v516, 0.5
      %v533 = vadd.f32 %v517, 0.5
      %v534 = vadd.f32 %v518, 0.5
      %v535 = vadd.f32 %v519, 0.5
      %v536 = vadd.f32 %v520, 0.5
      %v537 = vadd.f32 %v521, 0.5
      %v538 = vadd.f32 %v522, 0.5
      %v539 = vadd.f32 %v523, 0.5
      %v540 = vadd.f32 %v524, 0.5
      %v541 = vadd.f32 %v525, 0.5
      %v542 = vadd.f32 %v526, 0.5
      %v543 = vmax.f32 %v527, 0.0
      %v544 = vmax.f32 %v528, 0.0
      %v545 = vmax.f32 %v529, 0.0
      %v546 = vmax.f32 %v530, 0.0
      %v547 = vmax.f32 %v531, 0.0
      %v548 = vmax.f32 %v532, 0.0
      %v549 = vmax.f32 %v533, 0.0
      %v550 = vmax.f32 %v534, 0.0
      %v551 = vmax.f32 %v535, 0.0
      %v552 = vmax.f32 %v536, 0.0
      %v553 = vmax.f32 %v537, 0.0
      %v554 = vmax.f32 %v538, 0.0
      %v555 = vmax.f32 %v539, 0.0
      %v556 = vmax.f32 %v540, 0.0
      %v557 = vmax.f32 %v541, 0.0
      %v558 = vmax.f32 %v542, 0.0
      %v559 = vmul.f32 %v543, %v511
      %v560 = vmul.f32 %v544, %v512
      %v561 = vmul.f32 %v545, %v513
      %v562 = vmul.f32 %v546, %v514
      %v563 = vmul.f32 %v547, %v515
      %v564 = vmul.f32 %v548, %v516
      %v565 = vmul.f32 %v549, %v517
      %v566 = vmul.f32 %v550, %v518
      %v567 = vmul.f32 %v551, %v519
      %v568 = vmul.f32 %v552, %v520
      %v569 = vmul.f32 %v553, %v521
      %v570 = vmul.f32 %v554, %v522
      %v571 = vmul.f32 %v555, %v523
      %v572 = vmul.f32 %v556, %v524
      %v573 = vmul.f32 %v557, %v525
      %v574 = vmul.f32 %v558, %v526
      %v575 = vmul.f32 %v559, 64.0
      %v576 = vmul.f32 %v560, 64.0
      %v577 = vmul.f32 %v561, 64.0
      %v578 = vmul.f32 %v562, 64.0
      %v579 = vmul.f32 %v563, 64.0
      %v580 = vmul.f32 %v564, 64.0
      %v581 = vmul.f32 %v565, 64.0
      %v582 = vmul.f32 %v566, 64.0
      %v583 = vmul.f32 %v567, 64.0
      %v584 = vmul.f32 %v568, 64.0
      %v585 = vmul.f32 %v569, 64.0
      %v586 = vmul.f32 %v570, 64.0
      %v587 = vmul.f32 %v571, 64.0
      %v588 = vmul.f32 %v572, 64.0
      %v589 = vmul.f32 %v573, 64.0
      %v590 = vmul.f32 %v574, 64.0
      %v591 = vsel %vm239, %v575, -1e+30
      %v592 = vsel %vm240, %v576, -1e+30
      %v593 = vsel %vm241, %v577, -1e+30
      %v594 = vsel %vm242, %v578, -1e+30
      %v595 = vsel %vm243, %v579, -1e+30
      %v596 = vsel %vm244, %v580, -1e+30
      %v597 = vsel %vm245, %v581, -1e+30
      %v598 = vsel %vm246, %v582, -1e+30
      %v599 = vsel %vm247, %v583, -1e+30
      %v600 = vsel %vm248, %v584, -1e+30
      %v601 = vsel %vm249, %v585, -1e+30
      %v602 = vsel %vm250, %v586, -1e+30
      %v603 = vsel %vm251, %v587, -1e+30
      %v604 = vsel %vm252, %v588, -1e+30
      %v605 = vsel %vm253, %v589, -1e+30
      %v606 = vsel %vm254, %v590, -1e+30
      %v607 = vld [vmem:[#allocation4] sm:$0xff]
      %v608 = vld [vmem:[#allocation4 + $0x8] sm:$0xff]
      %v609 = vld [vmem:[#allocation4 + $0x10] sm:$0xff]
      %v610 = vld [vmem:[#allocation4 + $0x18] sm:$0xff]
      %v611 = vld [vmem:[#allocation4 + $0x20] sm:$0xff]
      %v612 = vld [vmem:[#allocation4 + $0x28] sm:$0xff]
      %v613 = vld [vmem:[#allocation4 + $0x30] sm:$0xff]
      %v614 = vld [vmem:[#allocation4 + $0x38] sm:$0xff]
      %v615 = vld [vmem:[#allocation4 + $0x40] sm:$0xff]
      %v616 = vld [vmem:[#allocation4 + $0x48] sm:$0xff]
      %v617 = vld [vmem:[#allocation4 + $0x50] sm:$0xff]
      %v618 = vld [vmem:[#allocation4 + $0x58] sm:$0xff]
      %v619 = vld [vmem:[#allocation4 + $0x60] sm:$0xff]
      %v620 = vld [vmem:[#allocation4 + $0x68] sm:$0xff]
      %v621 = vld [vmem:[#allocation4 + $0x70] sm:$0xff]
      %v622 = vld [vmem:[#allocation4 + $0x78] sm:$0xff]
      %v623 = vmax.f32 %v607, %v591
      %v624 = vmax.f32 %v608, %v592
      %v625 = vmax.f32 %v609, %v593
      %v626 = vmax.f32 %v610, %v594
      %v627 = vmax.f32 %v611, %v595
      %v628 = vmax.f32 %v612, %v596
      %v629 = vmax.f32 %v613, %v597
      %v630 = vmax.f32 %v614, %v598
      %v631 = vmax.f32 %v615, %v599
      %v632 = vmax.f32 %v616, %v600
      %v633 = vmax.f32 %v617, %v601
      %v634 = vmax.f32 %v618, %v602
      %v635 = vmax.f32 %v619, %v603
      %v636 = vmax.f32 %v620, %v604
      %v637 = vmax.f32 %v621, %v605
      %v638 = vmax.f32 %v622, %v606
      %v639 = vld [vmem:[#allocation5] sm:$0xff]
      %v640 = vld [vmem:[#allocation5 + $0x8] sm:$0xff]
      %v641 = vld [vmem:[#allocation5 + $0x10] sm:$0xff]
      %v642 = vld [vmem:[#allocation5 + $0x18] sm:$0xff]
      %v643 = vld [vmem:[#allocation5 + $0x20] sm:$0xff]
      %v644 = vld [vmem:[#allocation5 + $0x28] sm:$0xff]
      %v645 = vld [vmem:[#allocation5 + $0x30] sm:$0xff]
      %v646 = vld [vmem:[#allocation5 + $0x38] sm:$0xff]
      %v647 = vld [vmem:[#allocation5 + $0x40] sm:$0xff]
      %v648 = vld [vmem:[#allocation5 + $0x48] sm:$0xff]
      %v649 = vld [vmem:[#allocation5 + $0x50] sm:$0xff]
      %v650 = vld [vmem:[#allocation5 + $0x58] sm:$0xff]
      %v651 = vld [vmem:[#allocation5 + $0x60] sm:$0xff]
      %v652 = vld [vmem:[#allocation5 + $0x68] sm:$0xff]
      %v653 = vld [vmem:[#allocation5 + $0x70] sm:$0xff]
      %v654 = vld [vmem:[#allocation5 + $0x78] sm:$0xff]
      %v655 = vsub.f32 %v607, %v623
      %v656 = vsub.f32 %v608, %v624
      %v657 = vsub.f32 %v609, %v625
      %v658 = vsub.f32 %v610, %v626
      %v659 = vsub.f32 %v611, %v627
      %v660 = vsub.f32 %v612, %v628
      %v661 = vsub.f32 %v613, %v629
      %v662 = vsub.f32 %v614, %v630
      %v663 = vsub.f32 %v615, %v631
      %v664 = vsub.f32 %v616, %v632
      %v665 = vsub.f32 %v617, %v633
      %v666 = vsub.f32 %v618, %v634
      %v667 = vsub.f32 %v619, %v635
      %v668 = vsub.f32 %v620, %v636
      %v669 = vsub.f32 %v621, %v637
      %v670 = vsub.f32 %v622, %v638
      %v671 = vmul.f32 %v655, 1.442695
      %v672 = vpow.pop %v671
      %v673 = vmul.f32 %v656, 1.442695
      %v674 = vpow.pop %v673
      %v675 = vmul.f32 %v657, 1.442695
      %v676 = vpow.pop %v675
      %v677 = vmul.f32 %v658, 1.442695
      %v678 = vpow.pop %v677
      %v679 = vmul.f32 %v659, 1.442695
      %v680 = vpow.pop %v679
      %v681 = vmul.f32 %v660, 1.442695
      %v682 = vpow.pop %v681
      %v683 = vmul.f32 %v661, 1.442695
      %v684 = vpow.pop %v683
      %v685 = vmul.f32 %v662, 1.442695
      %v686 = vpow.pop %v685
      %v687 = vmul.f32 %v663, 1.442695
      %v688 = vpow.pop %v687
      %v689 = vmul.f32 %v664, 1.442695
      %v690 = vpow.pop %v689
      %v691 = vmul.f32 %v665, 1.442695
      %v692 = vpow.pop %v691
      %v693 = vmul.f32 %v666, 1.442695
      %v694 = vpow.pop %v693
      %v695 = vmul.f32 %v667, 1.442695
      %v696 = vpow.pop %v695
      %v697 = vmul.f32 %v668, 1.442695
      %v698 = vpow.pop %v697
      %v699 = vmul.f32 %v669, 1.442695
      %v700 = vpow.pop %v699
      %v701 = vmul.f32 %v670, 1.442695
      %v702 = vpow.pop %v701
      %v703 = vmul.f32 %v639, %v672
      %v704 = vmul.f32 %v640, %v674
      %v705 = vmul.f32 %v641, %v676
      %v706 = vmul.f32 %v642, %v678
      %v707 = vmul.f32 %v643, %v680
      %v708 = vmul.f32 %v644, %v682
      %v709 = vmul.f32 %v645, %v684
      %v710 = vmul.f32 %v646, %v686
      %v711 = vmul.f32 %v647, %v688
      %v712 = vmul.f32 %v648, %v690
      %v713 = vmul.f32 %v649, %v692
      %v714 = vmul.f32 %v650, %v694
      %v715 = vmul.f32 %v651, %v696
      %v716 = vmul.f32 %v652, %v698
      %v717 = vmul.f32 %v653, %v700
      %v718 = vmul.f32 %v654, %v702
      %v719 = vsub.f32 %v591, %v623
      %v720 = vsub.f32 %v592, %v624
      %v721 = vsub.f32 %v593, %v625
      %v722 = vsub.f32 %v594, %v626
      %v723 = vsub.f32 %v595, %v627
      %v724 = vsub.f32 %v596, %v628
      %v725 = vsub.f32 %v597, %v629
      %v726 = vsub.f32 %v598, %v630
      %v727 = vsub.f32 %v599, %v631
      %v728 = vsub.f32 %v600, %v632
      %v729 = vsub.f32 %v601, %v633
      %v730 = vsub.f32 %v602, %v634
      %v731 = vsub.f32 %v603, %v635
      %v732 = vsub.f32 %v604, %v636
      %v733 = vsub.f32 %v605, %v637
      %v734 = vsub.f32 %v606, %v638
      %v735 = vmul.f32 %v719, 1.442695
      %v736 = vpow.pop %v735
      %v737 = vmul.f32 %v720, 1.442695
      %v738 = vpow.pop %v737
      %v739 = vmul.f32 %v721, 1.442695
      %v740 = vpow.pop %v739
      %v741 = vmul.f32 %v722, 1.442695
      %v742 = vpow.pop %v741
      %v743 = vmul.f32 %v723, 1.442695
      %v744 = vpow.pop %v743
      %v745 = vmul.f32 %v724, 1.442695
      %v746 = vpow.pop %v745
      %v747 = vmul.f32 %v725, 1.442695
      %v748 = vpow.pop %v747
      %v749 = vmul.f32 %v726, 1.442695
      %v750 = vpow.pop %v749
      %v751 = vmul.f32 %v727, 1.442695
      %v752 = vpow.pop %v751
      %v753 = vmul.f32 %v728, 1.442695
      %v754 = vpow.pop %v753
      %v755 = vmul.f32 %v729, 1.442695
      %v756 = vpow.pop %v755
      %v757 = vmul.f32 %v730, 1.442695
      %v758 = vpow.pop %v757
      %v759 = vmul.f32 %v731, 1.442695
      %v760 = vpow.pop %v759
      %v761 = vmul.f32 %v732, 1.442695
      %v762 = vpow.pop %v761
      %v763 = vmul.f32 %v733, 1.442695
      %v764 = vpow.pop %v763
      %v765 = vmul.f32 %v734, 1.442695
      %v766 = vpow.pop %v765
      %v767 = vadd.f32 %v736, 0.0
      %v768 = vadd.f32 %v738, 0.0
      %v769 = vadd.f32 %v740, 0.0
      %v770 = vadd.f32 %v742, 0.0
      %v771 = vadd.f32 %v744, 0.0
      %v772 = vadd.f32 %v746, 0.0
      %v773 = vadd.f32 %v748, 0.0
      %v774 = vadd.f32 %v750, 0.0
      %v775 = vadd.f32 %v752, 0.0
      %v776 = vadd.f32 %v754, 0.0
      %v777 = vadd.f32 %v756, 0.0
      %v778 = vadd.f32 %v758, 0.0
      %v779 = vadd.f32 %v760, 0.0
      %v780 = vadd.f32 %v762, 0.0
      %v781 = vadd.f32 %v764, 0.0
      %v782 = vadd.f32 %v766, 0.0
      %v783 = vadd.f32 %v703, %v767
      %v784 = vadd.f32 %v704, %v768
      %v785 = vadd.f32 %v705, %v769
      %v786 = vadd.f32 %v706, %v770
      %v787 = vadd.f32 %v707, %v771
      %v788 = vadd.f32 %v708, %v772
      %v789 = vadd.f32 %v709, %v773
      %v790 = vadd.f32 %v710, %v774
      %v791 = vadd.f32 %v711, %v775
      %v792 = vadd.f32 %v712, %v776
      %v793 = vadd.f32 %v713, %v777
      %v794 = vadd.f32 %v714, %v778
      %v795 = vadd.f32 %v715, %v779
      %v796 = vadd.f32 %v716, %v780
      %v797 = vadd.f32 %v717, %v781
      %v798 = vadd.f32 %v718, %v782
      %799 = vst [vmem:[#allocation5] sm:$0xff] %v783
      %800 = vst [vmem:[#allocation5 + $0x8] sm:$0xff] %v784
      %801 = vst [vmem:[#allocation5 + $0x10] sm:$0xff] %v785
      %802 = vst [vmem:[#allocation5 + $0x18] sm:$0xff] %v786
      %803 = vst [vmem:[#allocation5 + $0x20] sm:$0xff] %v787
      %804 = vst [vmem:[#allocation5 + $0x28] sm:$0xff] %v788
      %805 = vst [vmem:[#allocation5 + $0x30] sm:$0xff] %v789
      %806 = vst [vmem:[#allocation5 + $0x38] sm:$0xff] %v790
      %807 = vst [vmem:[#allocation5 + $0x40] sm:$0xff] %v791
      %808 = vst [vmem:[#allocation5 + $0x48] sm:$0xff] %v792
      %809 = vst [vmem:[#allocation5 + $0x50] sm:$0xff] %v793
      %810 = vst [vmem:[#allocation5 + $0x58] sm:$0xff] %v794
      %811 = vst [vmem:[#allocation5 + $0x60] sm:$0xff] %v795
      %812 = vst [vmem:[#allocation5 + $0x68] sm:$0xff] %v796
      %813 = vst [vmem:[#allocation5 + $0x70] sm:$0xff] %v797
      %814 = vst [vmem:[#allocation5 + $0x78] sm:$0xff] %v798
      %815 = vst [vmem:[#allocation4] sm:$0xff] %v623
      %816 = vst [vmem:[#allocation4 + $0x8] sm:$0xff] %v624
      %817 = vst [vmem:[#allocation4 + $0x10] sm:$0xff] %v625
      %818 = vst [vmem:[#allocation4 + $0x18] sm:$0xff] %v626
      %819 = vst [vmem:[#allocation4 + $0x20] sm:$0xff] %v627
      %820 = vst [vmem:[#allocation4 + $0x28] sm:$0xff] %v628
      %821 = vst [vmem:[#allocation4 + $0x30] sm:$0xff] %v629
      %822 = vst [vmem:[#allocation4 + $0x38] sm:$0xff] %v630
      %823 = vst [vmem:[#allocation4 + $0x40] sm:$0xff] %v631
      %824 = vst [vmem:[#allocation4 + $0x48] sm:$0xff] %v632
      %825 = vst [vmem:[#allocation4 + $0x50] sm:$0xff] %v633
      %826 = vst [vmem:[#allocation4 + $0x58] sm:$0xff] %v634
      %827 = vst [vmem:[#allocation4 + $0x60] sm:$0xff] %v635
      %828 = vst [vmem:[#allocation4 + $0x68] sm:$0xff] %v636
      %829 = vst [vmem:[#allocation4 + $0x70] sm:$0xff] %v637
      %830 = vst [vmem:[#allocation4 + $0x78] sm:$0xff] %v638
      %v831 = vld [vmem:[#allocation2] sm:$0xff]
      %v832 = vld [vmem:[#allocation2 + $0x8] sm:$0xff]
      %v833 = vld [vmem:[#allocation2 + $0x10] sm:$0xff]
      %v834 = vld [vmem:[#allocation2 + $0x18] sm:$0xff]
      %v835 = vld [vmem:[#allocation2 + $0x20] sm:$0xff]
      %v836 = vld [vmem:[#allocation2 + $0x28] sm:$0xff]
      %v837 = vld [vmem:[#allocation2 + $0x30] sm:$0xff]
      %v838 = vld [vmem:[#allocation2 + $0x38] sm:$0xff]
      %v839 = vld [vmem:[#allocation2 + $0x40] sm:$0xff]
      %v840 = vld [vmem:[#allocation2 + $0x48] sm:$0xff]
      %v841 = vld [vmem:[#allocation2 + $0x50] sm:$0xff]
      %v842 = vld [vmem:[#allocation2 + $0x58] sm:$0xff]
      %v843 = vld [vmem:[#allocation2 + $0x60] sm:$0xff]
      %v844 = vld [vmem:[#allocation2 + $0x68] sm:$0xff]
      %v845 = vld [vmem:[#allocation2 + $0x70] sm:$0xff]
      %v846 = vld [vmem:[#allocation2 + $0x78] sm:$0xff]
      %v847 = vmax.f32 %v831, %v835
      %v848 = vmax.f32 %v832, %v836
      %v849 = vmax.f32 %v833, %v837
      %v850 = vmax.f32 %v834, %v838
      %v851 = vmax.f32 %v847, %v839
      %v852 = vmax.f32 %v848, %v840
      %v853 = vmax.f32 %v849, %v841
      %v854 = vmax.f32 %v850, %v842
      %v855 = vmax.f32 %v851, %v843
      %v856 = vmax.f32 %v852, %v844
      %v857 = vmax.f32 %v853, %v845
      %v858 = vmax.f32 %v854, %v846
      %v859 = vmax.f32 %v855, %v856
      %v860 = vmax.f32 %v857, %v858
      %v861 = vmax.f32 %v859, %v860
      %862 = vmax.xlane.f32.xlu0 %v861
      %v863 = vpop.xlane.xlu0 %862
      %v864 = vrot.slane %v863, 4
      %v865 = vmax.f32 %v863, %v864
      %v866 = vrot.slane %v865, 2
      %v867 = vmax.f32 %v865, %v866
      %v868 = vrot.slane %v867, 1
      %v869 = vmax.f32 %v867, %v868
      %s870 = vtos %v869
      %v871 = vstv %s870
      %v872 = vld [vmem:[#allocation3] sm:$0xff]
      %v873 = vld [vmem:[#allocation3 + $0x8] sm:$0xff]
      %v874 = vld [vmem:[#allocation3 + $0x10] sm:$0xff]
      %v875 = vld [vmem:[#allocation3 + $0x18] sm:$0xff]
      %v876 = vld [vmem:[#allocation3 + $0x20] sm:$0xff]
      %v877 = vld [vmem:[#allocation3 + $0x28] sm:$0xff]
      %v878 = vld [vmem:[#allocation3 + $0x30] sm:$0xff]
      %v879 = vld [vmem:[#allocation3 + $0x38] sm:$0xff]
      %v880 = vld [vmem:[#allocation3 + $0x40] sm:$0xff]
      %v881 = vld [vmem:[#allocation3 + $0x48] sm:$0xff]
      %v882 = vld [vmem:[#allocation3 + $0x50] sm:$0xff]
      %v883 = vld [vmem:[#allocation3 + $0x58] sm:$0xff]
      %v884 = vld [vmem:[#allocation3 + $0x60] sm:$0xff]
      %v885 = vld [vmem:[#allocation3 + $0x68] sm:$0xff]
      %v886 = vld [vmem:[#allocation3 + $0x70] sm:$0xff]
      %v887 = vld [vmem:[#allocation3 + $0x78] sm:$0xff]
      %v888 = vsub.f32 %v831, %v871
      %v889 = vsub.f32 %v832, %v871
      %v890 = vsub.f32 %v833, %v871
      %v891 = vsub.f32 %v834, %v871
      %v892 = vsub.f32 %v835, %v871
      %v893 = vsub.f32 %v836, %v871
      %v894 = vsub.f32 %v837, %v871
      %v895 = vsub.f32 %v838, %v871
      %v896 = vsub.f32 %v839, %v871
      %v897 = vsub.f32 %v840, %v871
      %v898 = vsub.f32 %v841, %v871
      %v899 = vsub.f32 %v842, %v871
      %v900 = vsub.f32 %v843, %v871
      %v901 = vsub.f32 %v844, %v871
      %v902 = vsub.f32 %v845, %v871
      %v903 = vsub.f32 %v846, %v871
      %v904 = vmul.f32 %v888, 1.442695
      %v905 = vpow.pop %v904
      %v906 = vmul.f32 %v889, 1.442695
      %v907 = vpow.pop %v906
      %v908 = vmul.f32 %v890, 1.442695
      %v909 = vpow.pop %v908
      %v910 = vmul.f32 %v891, 1.442695
      %v911 = vpow.pop %v910
      %v912 = vmul.f32 %v892, 1.442695
      %v913 = vpow.pop %v912
      %v914 = vmul.f32 %v893, 1.442695
      %v915 = vpow.pop %v914
      %v916 = vmul.f32 %v894, 1.442695
      %v917 = vpow.pop %v916
      %v918 = vmul.f32 %v895, 1.442695
      %v919 = vpow.pop %v918
      %v920 = vmul.f32 %v896, 1.442695
      %v921 = vpow.pop %v920
      %v922 = vmul.f32 %v897, 1.442695
      %v923 = vpow.pop %v922
      %v924 = vmul.f32 %v898, 1.442695
      %v925 = vpow.pop %v924
      %v926 = vmul.f32 %v899, 1.442695
      %v927 = vpow.pop %v926
      %v928 = vmul.f32 %v900, 1.442695
      %v929 = vpow.pop %v928
      %v930 = vmul.f32 %v901, 1.442695
      %v931 = vpow.pop %v930
      %v932 = vmul.f32 %v902, 1.442695
      %v933 = vpow.pop %v932
      %v934 = vmul.f32 %v903, 1.442695
      %v935 = vpow.pop %v934
      %v936 = vmul.f32 %v872, %v905
      %v937 = vmul.f32 %v873, %v907
      %v938 = vmul.f32 %v874, %v909
      %v939 = vmul.f32 %v875, %v911
      %v940 = vmul.f32 %v876, %v913
      %v941 = vmul.f32 %v877, %v915
      %v942 = vmul.f32 %v878, %v917
      %v943 = vmul.f32 %v879, %v919
      %v944 = vmul.f32 %v880, %v921
      %v945 = vmul.f32 %v881, %v923
      %v946 = vmul.f32 %v882, %v925
      %v947 = vmul.f32 %v883, %v927
      %v948 = vmul.f32 %v884, %v929
      %v949 = vmul.f32 %v885, %v931
      %v950 = vmul.f32 %v886, %v933
      %v951 = vmul.f32 %v887, %v935
      %v952 = vadd.f32 %v936, %v937
      %v953 = vadd.f32 %v952, %v938
      %v954 = vadd.f32 %v953, %v939
      %v955 = vadd.f32 %v954, %v940
      %v956 = vadd.f32 %v955, %v941
      %v957 = vadd.f32 %v956, %v942
      %v958 = vadd.f32 %v957, %v943
      %v959 = vadd.f32 %v958, %v944
      %v960 = vadd.f32 %v959, %v945
      %v961 = vadd.f32 %v960, %v946
      %v962 = vadd.f32 %v961, %v947
      %v963 = vadd.f32 %v962, %v948
      %v964 = vadd.f32 %v963, %v949
      %v965 = vadd.f32 %v964, %v950
      %v966 = vadd.f32 %v965, %v951
      %967 = vadd.xlane.f32.xlu0 %v966
      %v968 = vpop.xlane.xlu0 %967
      %v969 = vrot.slane %v968, 4
      %v970 = vadd.f32 %v968, %v969
      %v971 = vrot.slane %v970, 2
      %v972 = vadd.f32 %v970, %v971
      %v973 = vrot.slane %v972, 1
      %v974 = vadd.f32 %v972, %v973
      %s975 = vtos %v974
      %v976 = vstv %s975
      %v977 = vlog2.pop %v976
      %v978 = vmul.f32 %v977, 0.6931472
      %v979 = vadd.f32 %v871, %v978
      %vm980 = vcmask 0
      %981 = vst.msk [vmem:[#allocation11] sm:$0x1] %vm980, %v979
      %v982 = vld [vmem:[#allocation4] sm:$0xff]
      %v983 = vld [vmem:[#allocation4 + $0x8] sm:$0xff]
      %v984 = vld [vmem:[#allocation4 + $0x10] sm:$0xff]
      %v985 = vld [vmem:[#allocation4 + $0x18] sm:$0xff]
      %v986 = vld [vmem:[#allocation4 + $0x20] sm:$0xff]
      %v987 = vld [vmem:[#allocation4 + $0x28] sm:$0xff]
      %v988 = vld [vmem:[#allocation4 + $0x30] sm:$0xff]
      %v989 = vld [vmem:[#allocation4 + $0x38] sm:$0xff]
      %v990 = vld [vmem:[#allocation4 + $0x40] sm:$0xff]
      %v991 = vld [vmem:[#allocation4 + $0x48] sm:$0xff]
      %v992 = vld [vmem:[#allocation4 + $0x50] sm:$0xff]
      %v993 = vld [vmem:[#allocation4 + $0x58] sm:$0xff]
      %v994 = vld [vmem:[#allocation4 + $0x60] sm:$0xff]
      %v995 = vld [vmem:[#allocation4 + $0x68] sm:$0xff]
      %v996 = vld [vmem:[#allocation4 + $0x70] sm:$0xff]
      %v997 = vld [vmem:[#allocation4 + $0x78] sm:$0xff]
      %v998 = vmax.f32 %v982, %v986
      %v999 = vmax.f32 %v983, %v987
      %v1000 = vmax.f32 %v984, %v988
      %v1001 = vmax.f32 %v985, %v989
      %v1002 = vmax.f32 %v998, %v990
      %v1003 = vmax.f32 %v999, %v991
      %v1004 = vmax.f32 %v1000, %v992
      %v1005 = vmax.f32 %v1001, %v993
      %v1006 = vmax.f32 %v1002, %v994
      %v1007 = vmax.f32 %v1003, %v995
      %v1008 = vmax.f32 %v1004, %v996
      %v1009 = vmax.f32 %v1005, %v997
      %v1010 = vmax.f32 %v1006, %v1007
      %v1011 = vmax.f32 %v1008, %v1009
      %v1012 = vmax.f32 %v1010, %v1011
      %1013 = vmax.xlane.f32.xlu0 %v1012
      %v1014 = vpop.xlane.xlu0 %1013
      %v1015 = vrot.slane %v1014, 4
      %v1016 = vmax.f32 %v1014, %v1015
      %v1017 = vrot.slane %v1016, 2
      %v1018 = vmax.f32 %v1016, %v1017
      %v1019 = vrot.slane %v1018, 1
      %v1020 = vmax.f32 %v1018, %v1019
      %s1021 = vtos %v1020
      %v1022 = vstv %s1021
      %v1023 = vld [vmem:[#allocation5] sm:$0xff]
      %v1024 = vld [vmem:[#allocation5 + $0x8] sm:$0xff]
      %v1025 = vld [vmem:[#allocation5 + $0x10] sm:$0xff]
      %v1026 = vld [vmem:[#allocation5 + $0x18] sm:$0xff]
      %v1027 = vld [vmem:[#allocation5 + $0x20] sm:$0xff]
      %v1028 = vld [vmem:[#allocation5 + $0x28] sm:$0xff]
      %v1029 = vld [vmem:[#allocation5 + $0x30] sm:$0xff]
      %v1030 = vld [vmem:[#allocation5 + $0x38] sm:$0xff]
      %v1031 = vld [vmem:[#allocation5 + $0x40] sm:$0xff]
      %v1032 = vld [vmem:[#allocation5 + $0x48] sm:$0xff]
      %v1033 = vld [vmem:[#allocation5 + $0x50] sm:$0xff]
      %v1034 = vld [vmem:[#allocation5 + $0x58] sm:$0xff]
      %v1035 = vld [vmem:[#allocation5 + $0x60] sm:$0xff]
      %v1036 = vld [vmem:[#allocation5 + $0x68] sm:$0xff]
      %v1037 = vld [vmem:[#allocation5 + $0x70] sm:$0xff]
      %v1038 = vld [vmem:[#allocation5 + $0x78] sm:$0xff]
      %v1039 = vsub.f32 %v982, %v1022
      %v1040 = vsub.f32 %v983, %v1022
      %v1041 = vsub.f32 %v984, %v1022
      %v1042 = vsub.f32 %v985, %v1022
      %v1043 = vsub.f32 %v986, %v1022
      %v1044 = vsub.f32 %v987, %v1022
      %v1045 = vsub.f32 %v988, %v1022
      %v1046 = vsub.f32 %v989, %v1022
      %v1047 = vsub.f32 %v990, %v1022
      %v1048 = vsub.f32 %v991, %v1022
      %v1049 = vsub.f32 %v992, %v1022
      %v1050 = vsub.f32 %v993, %v1022
      %v1051 = vsub.f32 %v994, %v1022
      %v1052 = vsub.f32 %v995, %v1022
      %v1053 = vsub.f32 %v996, %v1022
      %v1054 = vsub.f32 %v997, %v1022
      %v1055 = vmul.f32 %v1039, 1.442695
      %v1056 = vpow.pop %v1055
      %v1057 = vmul.f32 %v1040, 1.442695
      %v1058 = vpow.pop %v1057
      %v1059 = vmul.f32 %v1041, 1.442695
      %v1060 = vpow.pop %v1059
      %v1061 = vmul.f32 %v1042, 1.442695
      %v1062 = vpow.pop %v1061
      %v1063 = vmul.f32 %v1043, 1.442695
      %v1064 = vpow.pop %v1063
      %v1065 = vmul.f32 %v1044, 1.442695
      %v1066 = vpow.pop %v1065
      %v1067 = vmul.f32 %v1045, 1.442695
      %v1068 = vpow.pop %v1067
      %v1069 = vmul.f32 %v1046, 1.442695
      %v1070 = vpow.pop %v1069
      %v1071 = vmul.f32 %v1047, 1.442695
      %v1072 = vpow.pop %v1071
      %v1073 = vmul.f32 %v1048, 1.442695
      %v1074 = vpow.pop %v1073
      %v1075 = vmul.f32 %v1049, 1.442695
      %v1076 = vpow.pop %v1075
      %v1077 = vmul.f32 %v1050, 1.442695
      %v1078 = vpow.pop %v1077
      %v1079 = vmul.f32 %v1051, 1.442695
      %v1080 = vpow.pop %v1079
      %v1081 = vmul.f32 %v1052, 1.442695
      %v1082 = vpow.pop %v1081
      %v1083 = vmul.f32 %v1053, 1.442695
      %v1084 = vpow.pop %v1083
      %v1085 = vmul.f32 %v1054, 1.442695
      %v1086 = vpow.pop %v1085
      %v1087 = vmul.f32 %v1023, %v1056
      %v1088 = vmul.f32 %v1024, %v1058
      %v1089 = vmul.f32 %v1025, %v1060
      %v1090 = vmul.f32 %v1026, %v1062
      %v1091 = vmul.f32 %v1027, %v1064
      %v1092 = vmul.f32 %v1028, %v1066
      %v1093 = vmul.f32 %v1029, %v1068
      %v1094 = vmul.f32 %v1030, %v1070
      %v1095 = vmul.f32 %v1031, %v1072
      %v1096 = vmul.f32 %v1032, %v1074
      %v1097 = vmul.f32 %v1033, %v1076
      %v1098 = vmul.f32 %v1034, %v1078
      %v1099 = vmul.f32 %v1035, %v1080
      %v1100 = vmul.f32 %v1036, %v1082
      %v1101 = vmul.f32 %v1037, %v1084
      %v1102 = vmul.f32 %v1038, %v1086
      %v1103 = vadd.f32 %v1087, %v1088
      %v1104 = vadd.f32 %v1103, %v1089
      %v1105 = vadd.f32 %v1104, %v1090
      %v1106 = vadd.f32 %v1105, %v1091
      %v1107 = vadd.f32 %v1106, %v1092
      %v1108 = vadd.f32 %v1107, %v1093
      %v1109 = vadd.f32 %v1108, %v1094
      %v1110 = vadd.f32 %v1109, %v1095
      %v1111 = vadd.f32 %v1110, %v1096
      %v1112 = vadd.f32 %v1111, %v1097
      %v1113 = vadd.f32 %v1112, %v1098
      %v1114 = vadd.f32 %v1113, %v1099
      %v1115 = vadd.f32 %v1114, %v1100
      %v1116 = vadd.f32 %v1115, %v1101
      %v1117 = vadd.f32 %v1116, %v1102
      %1118 = vadd.xlane.f32.xlu0 %v1117
      %v1119 = vpop.xlane.xlu0 %1118
      %v1120 = vrot.slane %v1119, 4
      %v1121 = vadd.f32 %v1119, %v1120
      %v1122 = vrot.slane %v1121, 2
      %v1123 = vadd.f32 %v1121, %v1122
      %v1124 = vrot.slane %v1123, 1
      %v1125 = vadd.f32 %v1123, %v1124
      %s1126 = vtos %v1125
      %v1127 = vstv %s1126
      %v1128 = vlog2.pop %v1127
      %v1129 = vmul.f32 %v1128, 0.6931472
      %v1130 = vadd.f32 %v1022, %v1129
      %1131 = vst.msk [vmem:[#allocation12] sm:$0x1] %vm980, %v1130
    $region21: #{tpu_custom_call.1} parent=1 // pred_fallthru
      _
    // Predicated region
    $region22: #{tpu_custom_call.1} parent=1 // pred_check
      _
    $region23: #{tpu_custom_call.1} parent=1 // pred_check_branch
      %1133 = sbr.rel (0) target = $region25
    $region24: #{tpu_custom_call.1} parent=1 // pred_region
      %s1135 = ssub.s32 16, 16
      %1136 = vsyncadd [#allocation8], %s1135
      %s1138 = sshll.u32 [#allocation11], 4
      %s1139 = int_to_ptr.vmem [resolvable:$true] %s1138
      %1141 = dma.vmem_to_hbm [thread:$0]  %s1139, 16, %s2, [#allocation8]
    $region25: #{tpu_custom_call.1} parent=1 // pred_fallthru
      _
    // Predicated region
    $region26: #{tpu_custom_call.1} parent=1 // pred_check
      _
    $region27: #{tpu_custom_call.1} parent=1 // pred_check_branch
      %1143 = sbr.rel (0) target = $region29
    $region28: #{tpu_custom_call.1} parent=1 // pred_region
      %s1145 = ssub.s32 16, 16
      %1146 = vsyncadd [#allocation13], %s1145
      %s1148 = sshll.u32 [#allocation12], 4
      %s1149 = int_to_ptr.vmem [resolvable:$true] %s1148
      %1151 = dma.vmem_to_hbm [thread:$0]  %s1149, 16, %s3, [#allocation13]
    $region29: #{tpu_custom_call.1} parent=1 // pred_fallthru
      _
    // Predicated region
    $region30: #{tpu_custom_call.1} parent=1 // pred_check
      _
    $region31: #{tpu_custom_call.1} parent=1 // pred_check_branch
      %1153 = sbr.rel (0) target = $region33
    $region32: #{tpu_custom_call.1} parent=1 // pred_region
      %1154 = dma.done [#allocation8], 16
    $region33: #{tpu_custom_call.1} parent=1 // pred_fallthru
      _
    // Predicated region
    $region34: #{tpu_custom_call.1} parent=1 // pred_check
      _
    $region35: #{tpu_custom_call.1} parent=1 // pred_check_branch
      %1156 = sbr.rel (0) target = $region37
    $region36: #{tpu_custom_call.1} parent=1 // pred_region
      %1157 = dma.done [#allocation13], 16
    $region37: #{tpu_custom_call.1} parent=1 // pred_fallthru
      _
    %1158 = vsyncpa [#allocation7], 1
    %1159 = vsyncpa [#allocation10], 1
    %1160 = vsyncpa [#allocation8], 1
    %1161 = vsyncpa [#allocation13], 1

</llo_original>
